<compile_context>
chip_gen: v6e
topology: v6e:2x2x1
jax: 0.10.0
libtpu: 0.0.40
codegen_flags: <defaults>
</compile_context>

<pallas_src>
import jax
import jax.numpy as jnp
from jax.experimental import pallas as pl
from jax.experimental.pallas import tpu as pltpu


def _round_up(x, m):
    return (x + m - 1) // m * m


def _vmem_capacity_bytes():
    """Per-core VMEM capacity. Capability probe only (not an error swallow)."""
    try:
        cap = int(pltpu.get_tpu_info().vmem_capacity_bytes)
        if cap > 0:
            return cap
    except Exception:
        pass
    return 128 << 20  # v5e / v6e default


def _pick_b_blk(bsp, max_blk=128):
    """Batch tile: multiple of 8, <= max_blk, minimal padding waste."""
    if bsp <= max_blk:
        return bsp
    best_blk, best_waste = None, None
    for cand in range(max_blk, 7, -8):
        waste = (-bsp) % cand
        if waste == 0:
            return cand              # largest zero-waste tile
        if best_waste is None or waste < best_waste:
            best_blk, best_waste = cand, waste
    return best_blk


# ----------------------------------------------------------------------------
# Pallas kernel: serial part of an LSTM layer (hidden recurrence only).
# ----------------------------------------------------------------------------
def _lstm_recurrence_kernel(pre_ref, whh_ref, out_ref, h_scr, c_scr):
    """Grid = (batch_tiles, time_blocks); each call handles T_BLK timesteps.

    NOTE: the time axis is the LAST grid axis (innermost, sequentially
    iterated, "arbitrary"); the h/c scratch carry is only correct under that
    iteration order -- do not reorder the grid.

    pre_ref : (T_BLK, B_BLK, 4*Hp) bf16  hoisted x@W_ih^T + bias, gate-major,
                                         each gate zero-padded to Hp (mult of 128)
    whh_ref : (Hp, 4*Hp)           bf16  hidden->gates weight, padded/aligned
    out_ref : (T_BLK, B_BLK, Hp)   bf16  h_t for every timestep in the block
    h_scr   : (B_BLK, Hp) bf16 VMEM      hidden state (MXU operand dtype)
    c_scr   : (B_BLK, Hp) f32  VMEM      cell state (kept f32 for accuracy)
    """
    # Zero state at the start of every batch tile (first time block).
    @pl.when(pl.program_id(1) == 0)
    def _():
        h_scr[...] = jnp.zeros_like(h_scr)
        c_scr[...] = jnp.zeros_like(c_scr)

    t_blk = pre_ref.shape[0]
    hp = out_ref.shape[2]

    def step(t, carry):
        h_prev = h_scr[...]                       # bf16: feeds the MXU directly
        c_prev = c_scr[...]                       # f32
        # Only the h-recurrence matmul is on the serial critical path;
        # bf16 operands feed the MXU, accumulation and gate math stay f32.
        gates = pre_ref[t].astype(jnp.float32) + jnp.dot(
            h_prev, whh_ref[...], preferred_element_type=jnp.float32)
        # PyTorch LSTM gate order: i, f, g, o. Each slice is 128-lane aligned.
        i_g = jax.nn.sigmoid(gates[:, 0 * hp:1 * hp])
        f_g = jax.nn.sigmoid(gates[:, 1 * hp:2 * hp])
        g_g = jnp.tanh(gates[:, 2 * hp:3 * hp])
        o_g = jax.nn.sigmoid(gates[:, 3 * hp:4 * hp])
        c_t = f_g * c_prev + i_g * g_g
        h_t = o_g * jnp.tanh(c_t)
        c_scr[...] = c_t
        h_bf = h_t.astype(jnp.bfloat16)
        h_scr[...] = h_bf
        out_ref[t] = h_bf                          # lane-dense bf16 store
        return carry

    jax.lax.fori_loop(0, t_blk, step, 0,
                      unroll=True if t_blk <= 16 else 8)


# ----------------------------------------------------------------------------
# One LSTM layer over an already (time/batch)-padded bf16 input.
# ----------------------------------------------------------------------------
def _lstm_layer_pallas_padded(x_pad, w_ih, w_hh, b_ih, b_hh, *,
                              hp, t_blk, b_blk, vmem_capacity):
    """x_pad: (slp, bsp, in_p) bf16 (zero-padded). Returns (slp, bsp, hp) bf16."""
    slp, bsp, in_p = x_pad.shape
    four_h, in_sz = w_ih.shape
    h_sz = four_h // 4
    assert in_sz <= in_p and h_sz <= hp
    assert slp % t_blk == 0 and bsp % b_blk == 0
    assert hp % 128 == 0 and b_blk % 8 == 0

    # ---- (1) Hoisted input projection, produced directly in the padded,
    #          gate-major layout: pad the SMALL weight/bias, not the big
    #          activation. bf16 MXU operands, f32 accumulation. ---------------
    wih = w_ih.reshape(4, h_sz, in_sz)                     # (gate, out, in)
    wih = jnp.pad(wih, ((0, 0), (0, hp - h_sz), (0, in_p - in_sz)))
    wih = jnp.transpose(wih, (2, 0, 1)).reshape(in_p, 4 * hp).astype(jnp.bfloat16)
    bias = jnp.pad((b_ih + b_hh).reshape(4, h_sz),
                   ((0, 0), (0, hp - h_sz))).reshape(4 * hp)
    pre = (jnp.dot(x_pad, wih, preferred_element_type=jnp.float32)
           + bias).astype(jnp.bfloat16)                    # (slp, bsp, 4*Hp) bf16

    # W_hh (4H, H) torch layout -> (Hp, 4*Hp), zero-padded, bf16 MXU operand
    whh = w_hh.reshape(4, h_sz, h_sz)                      # (gate, out, in)
    whh = jnp.transpose(whh, (2, 0, 1))                    # (in, gate, out)
    whh = jnp.pad(whh, ((0, hp - h_sz), (0, 0), (0, hp - h_sz)))
    whh = whh.reshape(hp, 4 * hp).astype(jnp.bfloat16)

    n_btiles = bsp // b_blk
    n_tblocks = slp // t_blk

    # ---- (2) Explicit VMEM estimate -> per-generation vmem limit ------------
    pre_blk = t_blk * b_blk * 4 * hp * 2          # bf16
    out_blk = t_blk * b_blk * hp * 2              # bf16
    whh_b = hp * 4 * hp * 2                       # bf16 (double-buffered below)
    scratch_b = b_blk * hp * (2 + 4)              # bf16 h + f32 c
    est = 2 * pre_blk + 2 * out_blk + 2 * whh_b + scratch_b
    vmem_limit = int(min(int(0.92 * vmem_capacity),
                         max(32 << 20, int(1.25 * est))))

    out_pad = pl.pallas_call(
        _lstm_recurrence_kernel,
        out_shape=jax.ShapeDtypeStruct((slp, bsp, hp), jnp.bfloat16),
        grid=(n_btiles, n_tblocks),          # time LAST => sequential innermost
        in_specs=[
            pl.BlockSpec((t_blk, b_blk, 4 * hp), lambda b, t: (t, b, 0)),
            pl.BlockSpec((hp, 4 * hp), lambda b, t: (0, 0)),   # resident weight
        ],
        out_specs=pl.BlockSpec((t_blk, b_blk, hp), lambda b, t: (t, b, 0)),
        scratch_shapes=[
            pltpu.VMEM((b_blk, hp), jnp.bfloat16),   # h state (operand dtype)
            pltpu.VMEM((b_blk, hp), jnp.float32),    # c state (f32 accuracy)
        ],
        compiler_params=pltpu.CompilerParams(
            dimension_semantics=("parallel", "arbitrary"),
            vmem_limit_bytes=vmem_limit,
        ),
    )(pre, whh)
    return out_pad


# ----------------------------------------------------------------------------
# LSTM stack: padded bf16 activations flow between layers; slice once per
# returned output (no per-layer re-pad).
# ----------------------------------------------------------------------------
def rnn_stack_pallas(layer_params, emb):
    sl, bs, _ = emb.shape
    h_sizes = [lp["w_hh"].shape[1] for lp in layer_params]
    hps = [_round_up(h, 128) for h in h_sizes]

    # ---- batch / time tiling, derived from per-generation VMEM budget ------
    capacity = _vmem_capacity_bytes()
    bsp = _round_up(bs, 8)
    b_blk = _pick_b_blk(bsp)
    bsp = _round_up(bsp, b_blk)
    if bsp // b_blk < 2 and bsp >= 16 and bsp % 16 == 0:
        b_blk = bsp // 2      # >= 2 batch tiles so megacore can split the batch

    hp_max = max(hps)
    budget = int(0.70 * capacity)
    fixed = 2 * (hp_max * 4 * hp_max * 2) + b_blk * hp_max * (2 + 4)
    per_t = 2 * b_blk * (4 * hp_max + hp_max) * 2          # dbl-buffered bf16
    if budget > fixed:
        t_budget = (budget - fixed) // per_t
    else:
        t_budget = 1
    t_blk = int(max(1, min(sl, 128, t_budget)))
    slp = _round_up(sl, t_blk)

    # Pad the (small) layer-0 input once; later layers stay padded throughout.
    x = jnp.pad(emb.astype(jnp.bfloat16),
                ((0, slp - sl), (0, bsp - bs), (0, 0)))

    raw_outputs = []
    for lp, hp, h_sz in zip(layer_params, hps, h_sizes):
        x = _lstm_layer_pallas_padded(
            x, lp["w_ih"], lp["w_hh"], lp["b_ih"], lp["b_hh"],
            hp=hp, t_blk=t_blk, b_blk=b_blk, vmem_capacity=capacity)
        raw_outputs.append(x[:sl, :bs, :h_sz].astype(jnp.float32))
    return raw_outputs


# ----------------------------------------------------------------------------
# Pure-JAX reference (correctness check, f32 throughout)
# ----------------------------------------------------------------------------
def lstm_layer_ref(x, w_ih, w_hh, b_ih, b_hh):
    h_sz = w_hh.shape[1]
    bs = x.shape[1]

    def step(carry, x_t):
        h, c = carry
        gates = x_t @ w_ih.T + h @ w_hh.T + b_ih + b_hh
        i_g = jax.nn.sigmoid(gates[:, 0 * h_sz:1 * h_sz])
        f_g = jax.nn.sigmoid(gates[:, 1 * h_sz:2 * h_sz])
        g_g = jnp.tanh(gates[:, 2 * h_sz:3 * h_sz])
        o_g = jax.nn.sigmoid(gates[:, 3 * h_sz:4 * h_sz])
        c_t = f_g * c + i_g * g_g
        h_t = o_g * jnp.tanh(c_t)
        return (h_t, c_t), h_t

    h0 = jnp.zeros((bs, h_sz), jnp.float32)
    c0 = jnp.zeros((bs, h_sz), jnp.float32)
    _, ys = jax.lax.scan(step, (h0, c0), x)
    return ys


def rnn_stack_ref(layer_params, emb):
    x = emb
    raw_outputs = []
    for lp in layer_params:
        x = lstm_layer_ref(x, lp["w_ih"], lp["w_hh"], lp["b_ih"], lp["b_hh"])
        raw_outputs.append(x)
    return raw_outputs


# ----------------------------------------------------------------------------
# RNN_Encoder: parameter init + forward
# ----------------------------------------------------------------------------
def init_rnn_encoder_params(key, ntoken, emb_sz, n_hid, n_layers):
    params = {}
    key, k_emb = jax.random.split(key)
    # encoder.weight.data.uniform_(-0.1, 0.1)
    params["embedding"] = jax.random.uniform(
        k_emb, (ntoken, emb_sz), jnp.float32, minval=-0.1, maxval=0.1)
    layers = []
    for l in range(n_layers):
        in_sz = emb_sz if l == 0 else n_hid
        h_sz = n_hid if l != n_layers - 1 else emb_sz
        stdv = 1.0 / float(jnp.sqrt(jnp.float32(h_sz)))
        key, k1, k2, k3, k4 = jax.random.split(key, 5)
        layers.append(dict(
            w_ih=jax.random.uniform(k1, (4 * h_sz, in_sz), jnp.float32,
                                    minval=-stdv, maxval=stdv),
            w_hh=jax.random.uniform(k2, (4 * h_sz, h_sz), jnp.float32,
                                    minval=-stdv, maxval=stdv),
            b_ih=jax.random.uniform(k3, (4 * h_sz,), jnp.float32,
                                    minval=-stdv, maxval=stdv),
            b_hh=jax.random.uniform(k4, (4 * h_sz,), jnp.float32,
                                    minval=-stdv, maxval=stdv),
        ))
    params["layers"] = layers
    return params


def rnn_encoder_forward(params, tokens, use_pallas=True):
    """tokens: (sl, bs) int32. Returns (raw_outputs, outputs) lists.

    Eval mode: dropoute / dropouti / dropouth / wdrop are identity, so
    outputs == raw_outputs (matching the PyTorch module with training=False).
    Hidden state is zero-initialized (fresh reset()), i.e. no cross-call carry.
    """
    # TODO(synk): training-mode EmbeddingDropout/LockedDropout/WeightDrop and
    # cross-batch hidden-state carry (repackage_var) are not modeled here.
    emb = jnp.take(params["embedding"], tokens, axis=0)    # (sl, bs, emb_sz)
    if use_pallas:
        raw_outputs = rnn_stack_pallas(params["layers"], emb)
    else:
        raw_outputs = rnn_stack_ref(params["layers"], emb)
    outputs = list(raw_outputs)          # LockedDropout is identity in eval
    return raw_outputs, outputs


# ----------------------------------------------------------------------------
if __name__ == "__main__":
    ntoken, emb_sz, n_hid, n_layers, pad_token = 50, 16, 32, 3, 0
    sl, bs = 8, 2

    key = jax.random.PRNGKey(0)
    key, k_tok, k_par = jax.random.split(key, 3)
    tokens = jax.random.randint(k_tok, (sl, bs), 0, ntoken, dtype=jnp.int32)
    params = init_rnn_encoder_params(k_par, ntoken, emb_sz, n_hid, n_layers)

    raw_outputs, outputs = rnn_encoder_forward(params, tokens, use_pallas=True)
    raw_outputs = [jax.block_until_ready(o) for o in raw_outputs]

    # Correctness check against pure-JAX f32 reference (bf16 MXU operands and
    # bf16 activation streaming in the kernel -> loosened tolerance).
    ref_raw, _ = rnn_encoder_forward(params, tokens, use_pallas=False)
    for got, ref in zip(raw_outputs, ref_raw):
        assert got.shape == ref.shape
        err = float(jnp.max(jnp.abs(got - ref)))
        assert err < 2e-2, f"mismatch vs reference: max abs err {err}"

    # Expected shapes: layers 0..n-2 -> (sl, bs, n_hid); last -> (sl, bs, emb_sz)
    assert raw_outputs[0].shape == (sl, bs, n_hid)
    assert raw_outputs[-1].shape == (sl, bs, emb_sz)

    print("KERNEL_OK")
</pallas_src>

<mosaic_0001>
module attributes {stable_mosaic.version = 11 : i64} {
  func.func @_lstm_recurrence_kernel(%arg0: i32, %arg1: i32, %arg2: memref<8x8x512xbf16, #tpu.memory_space<vmem>>, %arg3: memref<128x512xbf16, #tpu.memory_space<vmem>>, %arg4: memref<8x8x128xbf16, #tpu.memory_space<vmem>>, %arg5: memref<8x128xbf16, #tpu.memory_space<vmem>>, %arg6: memref<8x128xf32, #tpu.memory_space<vmem>>) attributes {dimension_semantics = [#tpu.dimension_semantics<parallel>, #tpu.dimension_semantics<arbitrary>], iteration_bounds = array<i64: 1, 1>, scalar_prefetch = 0 : i64, scratch_operands = 2 : i64, tpu.core_type = #tpu.core_type<tc>, window_params = [{transform_indices = @transform_0, window_bounds = array<i64: 8, 8, 512>}, {pipeline_mode = #tpu.pipeline_mode<synchronous>, transform_indices = @transform_1, window_bounds = array<i64: 128, 512>}, {transform_indices = @transform_2, window_bounds = array<i64: 8, 8, 128>}]} {
    %c0_i32 = arith.constant 0 : i32
    %0 = arith.cmpi eq, %arg1, %c0_i32 : i32
    %1 = arith.extui %0 : i1 to i32
    %c0_i32_0 = arith.constant 0 : i32
    %2 = arith.cmpi ne, %1, %c0_i32_0 : i32
    scf.if %2 {
      %cst_144 = arith.constant 0.000000e+00 : bf16
      %331 = vector.broadcast %cst_144 : bf16 to vector<8x128xbf16>
      %c0_145 = arith.constant 0 : index
      %c0_146 = arith.constant 0 : index
      %332 = vector.load %arg5[%c0_145, %c0_146] : memref<8x128xbf16, #tpu.memory_space<vmem>>, vector<8x128xbf16>
      tpu.vector_store %arg5[%c0_145, %c0_146], %331 {strides = array<i32>} : memref<8x128xbf16, #tpu.memory_space<vmem>>, vector<8x128xbf16>,
      %cst_147 = arith.constant 0.000000e+00 : f32
      %333 = vector.broadcast %cst_147 : f32 to vector<8x128xf32>
      %c0_148 = arith.constant 0 : index
      %c0_149 = arith.constant 0 : index
      %334 = vector.load %arg6[%c0_148, %c0_149] : memref<8x128xf32, #tpu.memory_space<vmem>>, vector<8x128xf32>
      tpu.vector_store %arg6[%c0_148, %c0_149], %333 {strides = array<i32>} : memref<8x128xf32, #tpu.memory_space<vmem>>, vector<8x128xf32>,
    } else {
    }
    %c0_i32_1 = arith.constant 0 : i32
    %c0 = arith.constant 0 : index
    %c0_2 = arith.constant 0 : index
    %3 = vector.load %arg5[%c0, %c0_2] : memref<8x128xbf16, #tpu.memory_space<vmem>>, vector<8x128xbf16>
    %c0_3 = arith.constant 0 : index
    %c0_4 = arith.constant 0 : index
    %4 = vector.load %arg6[%c0_3, %c0_4] : memref<8x128xf32, #tpu.memory_space<vmem>>, vector<8x128xf32>
    %5 = arith.index_cast %c0_i32_1 : i32 to index
    %c0_5 = arith.constant 0 : index
    %c0_6 = arith.constant 0 : index
    %6 = vector.load %arg2[%5, %c0_5, %c0_6] : memref<8x8x512xbf16, #tpu.memory_space<vmem>>, vector<1x8x512xbf16>
    %7 = vector.shape_cast %6 : vector<1x8x512xbf16> to vector<8x512xbf16>
    %8 = arith.extf %7 : vector<8x512xbf16> to vector<8x512xf32>
    %c0_7 = arith.constant 0 : index
    %c0_8 = arith.constant 0 : index
    %9 = vector.load %arg3[%c0_7, %c0_8] : memref<128x512xbf16, #tpu.memory_space<vmem>>, vector<128x512xbf16>
    %cst = arith.constant dense<0.000000e+00> : vector<8x512xf32>
    %10 = tpu.matmul %3, %9, %cst {dimension_numbers = #tpu.dot_dimension_numbers<[1], [0], [0], [1], [0, 0, 1, 1], [], []>} : vector<8x128xbf16>, vector<128x512xbf16>, vector<8x512xf32> -> vector<8x512xf32>
    %11 = arith.addf %8, %10 : vector<8x512xf32>
    %12 = vector.extract_strided_slice %11 {offsets = [0, 0], sizes = [8, 128], strides = [1, 1]} : vector<8x512xf32> to vector<8x128xf32>
    %13 = arith.negf %12 : vector<8x128xf32>
    %14 = math.exp %13 : vector<8x128xf32>
    %cst_9 = arith.constant 1.000000e+00 : f32
    %15 = vector.broadcast %cst_9 : f32 to vector<8x128xf32>
    %16 = arith.addf %15, %14 : vector<8x128xf32>
    %17 = arith.divf %15, %16 : vector<8x128xf32>
    %18 = vector.extract_strided_slice %11 {offsets = [0, 128], sizes = [8, 128], strides = [1, 1]} : vector<8x512xf32> to vector<8x128xf32>
    %19 = arith.negf %18 : vector<8x128xf32>
    %20 = math.exp %19 : vector<8x128xf32>
    %cst_10 = arith.constant 1.000000e+00 : f32
    %21 = vector.broadcast %cst_10 : f32 to vector<8x128xf32>
    %22 = arith.addf %21, %20 : vector<8x128xf32>
    %23 = arith.divf %21, %22 : vector<8x128xf32>
    %24 = vector.extract_strided_slice %11 {offsets = [0, 256], sizes = [8, 128], strides = [1, 1]} : vector<8x512xf32> to vector<8x128xf32>
    %25 = math.tanh %24 : vector<8x128xf32>
    %26 = vector.extract_strided_slice %11 {offsets = [0, 384], sizes = [8, 128], strides = [1, 1]} : vector<8x512xf32> to vector<8x128xf32>
    %27 = arith.negf %26 : vector<8x128xf32>
    %28 = math.exp %27 : vector<8x128xf32>
    %cst_11 = arith.constant 1.000000e+00 : f32
    %29 = vector.broadcast %cst_11 : f32 to vector<8x128xf32>
    %30 = arith.addf %29, %28 : vector<8x128xf32>
    %31 = arith.divf %29, %30 : vector<8x128xf32>
    %32 = arith.mulf %23, %4 : vector<8x128xf32>
    %33 = arith.mulf %17, %25 : vector<8x128xf32>
    %34 = arith.addf %32, %33 : vector<8x128xf32>
    %35 = math.tanh %34 : vector<8x128xf32>
    %36 = arith.mulf %31, %35 : vector<8x128xf32>
    %c0_12 = arith.constant 0 : index
    %c0_13 = arith.constant 0 : index
    %37 = vector.load %arg6[%c0_12, %c0_13] : memref<8x128xf32, #tpu.memory_space<vmem>>, vector<8x128xf32>
    tpu.vector_store %arg6[%c0_12, %c0_13], %34 {strides = array<i32>} : memref<8x128xf32, #tpu.memory_space<vmem>>, vector<8x128xf32>,
    %38 = arith.truncf %36 : vector<8x128xf32> to vector<8x128xbf16>
    %c0_14 = arith.constant 0 : index
    %c0_15 = arith.constant 0 : index
    %39 = vector.load %arg5[%c0_14, %c0_15] : memref<8x128xbf16, #tpu.memory_space<vmem>>, vector<8x128xbf16>
    tpu.vector_store %arg5[%c0_14, %c0_15], %38 {strides = array<i32>} : memref<8x128xbf16, #tpu.memory_space<vmem>>, vector<8x128xbf16>,
    %40 = arith.index_cast %c0_i32_1 : i32 to index
    %c0_16 = arith.constant 0 : index
    %c0_17 = arith.constant 0 : index
    %41 = vector.load %arg4[%40, %c0_16, %c0_17] : memref<8x8x128xbf16, #tpu.memory_space<vmem>>, vector<1x8x128xbf16>
    %42 = vector.shape_cast %41 : vector<1x8x128xbf16> to vector<8x128xbf16>
    %43 = vector.shape_cast %38 : vector<8x128xbf16> to vector<1x8x128xbf16>
    tpu.vector_store %arg4[%40, %c0_16, %c0_17], %43 {strides = array<i32>} : memref<8x8x128xbf16, #tpu.memory_space<vmem>>, vector<1x8x128xbf16>,
    %c1_i32 = arith.constant 1 : i32
    %c0_18 = arith.constant 0 : index
    %c0_19 = arith.constant 0 : index
    %44 = vector.load %arg5[%c0_18, %c0_19] : memref<8x128xbf16, #tpu.memory_space<vmem>>, vector<8x128xbf16>
    %c0_20 = arith.constant 0 : index
    %c0_21 = arith.constant 0 : index
    %45 = vector.load %arg6[%c0_20, %c0_21] : memref<8x128xf32, #tpu.memory_space<vmem>>, vector<8x128xf32>
    %46 = arith.index_cast %c1_i32 : i32 to index
    %c0_22 = arith.constant 0 : index
    %c0_23 = arith.constant 0 : index
    %47 = vector.load %arg2[%46, %c0_22, %c0_23] : memref<8x8x512xbf16, #tpu.memory_space<vmem>>, vector<1x8x512xbf16>
    %48 = vector.shape_cast %47 : vector<1x8x512xbf16> to vector<8x512xbf16>
    %49 = arith.extf %48 : vector<8x512xbf16> to vector<8x512xf32>
    %c0_24 = arith.constant 0 : index
    %c0_25 = arith.constant 0 : index
    %50 = vector.load %arg3[%c0_24, %c0_25] : memref<128x512xbf16, #tpu.memory_space<vmem>>, vector<128x512xbf16>
    %cst_26 = arith.constant dense<0.000000e+00> : vector<8x512xf32>
    %51 = tpu.matmul %44, %50, %cst_26 {dimension_numbers = #tpu.dot_dimension_numbers<[1], [0], [0], [1], [0, 0, 1, 1], [], []>} : vector<8x128xbf16>, vector<128x512xbf16>, vector<8x512xf32> -> vector<8x512xf32>
    %52 = arith.addf %49, %51 : vector<8x512xf32>
    %53 = vector.extract_strided_slice %52 {offsets = [0, 0], sizes = [8, 128], strides = [1, 1]} : vector<8x512xf32> to vector<8x128xf32>
    %54 = arith.negf %53 : vector<8x128xf32>
    %55 = math.exp %54 : vector<8x128xf32>
    %cst_27 = arith.constant 1.000000e+00 : f32
    %56 = vector.broadcast %cst_27 : f32 to vector<8x128xf32>
    %57 = arith.addf %56, %55 : vector<8x128xf32>
    %58 = arith.divf %56, %57 : vector<8x128xf32>
    %59 = vector.extract_strided_slice %52 {offsets = [0, 128], sizes = [8, 128], strides = [1, 1]} : vector<8x512xf32> to vector<8x128xf32>
    %60 = arith.negf %59 : vector<8x128xf32>
    %61 = math.exp %60 : vector<8x128xf32>
    %cst_28 = arith.constant 1.000000e+00 : f32
    %62 = vector.broadcast %cst_28 : f32 to vector<8x128xf32>
    %63 = arith.addf %62, %61 : vector<8x128xf32>
    %64 = arith.divf %62, %63 : vector<8x128xf32>
    %65 = vector.extract_strided_slice %52 {offsets = [0, 256], sizes = [8, 128], strides = [1, 1]} : vector<8x512xf32> to vector<8x128xf32>
    %66 = math.tanh %65 : vector<8x128xf32>
    %67 = vector.extract_strided_slice %52 {offsets = [0, 384], sizes = [8, 128], strides = [1, 1]} : vector<8x512xf32> to vector<8x128xf32>
    %68 = arith.negf %67 : vector<8x128xf32>
    %69 = math.exp %68 : vector<8x128xf32>
    %cst_29 = arith.constant 1.000000e+00 : f32
    %70 = vector.broadcast %cst_29 : f32 to vector<8x128xf32>
    %71 = arith.addf %70, %69 : vector<8x128xf32>
    %72 = arith.divf %70, %71 : vector<8x128xf32>
    %73 = arith.mulf %64, %45 : vector<8x128xf32>
    %74 = arith.mulf %58, %66 : vector<8x128xf32>
    %75 = arith.addf %73, %74 : vector<8x128xf32>
    %76 = math.tanh %75 : vector<8x128xf32>
    %77 = arith.mulf %72, %76 : vector<8x128xf32>
    %c0_30 = arith.constant 0 : index
    %c0_31 = arith.constant 0 : index
    %78 = vector.load %arg6[%c0_30, %c0_31] : memref<8x128xf32, #tpu.memory_space<vmem>>, vector<8x128xf32>
    tpu.vector_store %arg6[%c0_30, %c0_31], %75 {strides = array<i32>} : memref<8x128xf32, #tpu.memory_space<vmem>>, vector<8x128xf32>,
    %79 = arith.truncf %77 : vector<8x128xf32> to vector<8x128xbf16>
    %c0_32 = arith.constant 0 : index
    %c0_33 = arith.constant 0 : index
    %80 = vector.load %arg5[%c0_32, %c0_33] : memref<8x128xbf16, #tpu.memory_space<vmem>>, vector<8x128xbf16>
    tpu.vector_store %arg5[%c0_32, %c0_33], %79 {strides = array<i32>} : memref<8x128xbf16, #tpu.memory_space<vmem>>, vector<8x128xbf16>,
    %81 = arith.index_cast %c1_i32 : i32 to index
    %c0_34 = arith.constant 0 : index
    %c0_35 = arith.constant 0 : index
    %82 = vector.load %arg4[%81, %c0_34, %c0_35] : memref<8x8x128xbf16, #tpu.memory_space<vmem>>, vector<1x8x128xbf16>
    %83 = vector.shape_cast %82 : vector<1x8x128xbf16> to vector<8x128xbf16>
    %84 = vector.shape_cast %79 : vector<8x128xbf16> to vector<1x8x128xbf16>
    tpu.vector_store %arg4[%81, %c0_34, %c0_35], %84 {strides = array<i32>} : memref<8x8x128xbf16, #tpu.memory_space<vmem>>, vector<1x8x128xbf16>,
    %c2_i32 = arith.constant 2 : i32
    %c0_36 = arith.constant 0 : index
    %c0_37 = arith.constant 0 : index
    %85 = vector.load %arg5[%c0_36, %c0_37] : memref<8x128xbf16, #tpu.memory_space<vmem>>, vector<8x128xbf16>
    %c0_38 = arith.constant 0 : index
    %c0_39 = arith.constant 0 : index
    %86 = vector.load %arg6[%c0_38, %c0_39] : memref<8x128xf32, #tpu.memory_space<vmem>>, vector<8x128xf32>
    %87 = arith.index_cast %c2_i32 : i32 to index
    %c0_40 = arith.constant 0 : index
    %c0_41 = arith.constant 0 : index
    %88 = vector.load %arg2[%87, %c0_40, %c0_41] : memref<8x8x512xbf16, #tpu.memory_space<vmem>>, vector<1x8x512xbf16>
    %89 = vector.shape_cast %88 : vector<1x8x512xbf16> to vector<8x512xbf16>
    %90 = arith.extf %89 : vector<8x512xbf16> to vector<8x512xf32>
    %c0_42 = arith.constant 0 : index
    %c0_43 = arith.constant 0 : index
    %91 = vector.load %arg3[%c0_42, %c0_43] : memref<128x512xbf16, #tpu.memory_space<vmem>>, vector<128x512xbf16>
    %cst_44 = arith.constant dense<0.000000e+00> : vector<8x512xf32>
    %92 = tpu.matmul %85, %91, %cst_44 {dimension_numbers = #tpu.dot_dimension_numbers<[1], [0], [0], [1], [0, 0, 1, 1], [], []>} : vector<8x128xbf16>, vector<128x512xbf16>, vector<8x512xf32> -> vector<8x512xf32>
    %93 = arith.addf %90, %92 : vector<8x512xf32>
    %94 = vector.extract_strided_slice %93 {offsets = [0, 0], sizes = [8, 128], strides = [1, 1]} : vector<8x512xf32> to vector<8x128xf32>
    %95 = arith.negf %94 : vector<8x128xf32>
    %96 = math.exp %95 : vector<8x128xf32>
    %cst_45 = arith.constant 1.000000e+00 : f32
    %97 = vector.broadcast %cst_45 : f32 to vector<8x128xf32>
    %98 = arith.addf %97, %96 : vector<8x128xf32>
    %99 = arith.divf %97, %98 : vector<8x128xf32>
    %100 = vector.extract_strided_slice %93 {offsets = [0, 128], sizes = [8, 128], strides = [1, 1]} : vector<8x512xf32> to vector<8x128xf32>
    %101 = arith.negf %100 : vector<8x128xf32>
    %102 = math.exp %101 : vector<8x128xf32>
    %cst_46 = arith.constant 1.000000e+00 : f32
    %103 = vector.broadcast %cst_46 : f32 to vector<8x128xf32>
    %104 = arith.addf %103, %102 : vector<8x128xf32>
    %105 = arith.divf %103, %104 : vector<8x128xf32>
    %106 = vector.extract_strided_slice %93 {offsets = [0, 256], sizes = [8, 128], strides = [1, 1]} : vector<8x512xf32> to vector<8x128xf32>
    %107 = math.tanh %106 : vector<8x128xf32>
    %108 = vector.extract_strided_slice %93 {offsets = [0, 384], sizes = [8, 128], strides = [1, 1]} : vector<8x512xf32> to vector<8x128xf32>
    %109 = arith.negf %108 : vector<8x128xf32>
    %110 = math.exp %109 : vector<8x128xf32>
    %cst_47 = arith.constant 1.000000e+00 : f32
    %111 = vector.broadcast %cst_47 : f32 to vector<8x128xf32>
    %112 = arith.addf %111, %110 : vector<8x128xf32>
    %113 = arith.divf %111, %112 : vector<8x128xf32>
    %114 = arith.mulf %105, %86 : vector<8x128xf32>
    %115 = arith.mulf %99, %107 : vector<8x128xf32>
    %116 = arith.addf %114, %115 : vector<8x128xf32>
    %117 = math.tanh %116 : vector<8x128xf32>
    %118 = arith.mulf %113, %117 : vector<8x128xf32>
    %c0_48 = arith.constant 0 : index
    %c0_49 = arith.constant 0 : index
    %119 = vector.load %arg6[%c0_48, %c0_49] : memref<8x128xf32, #tpu.memory_space<vmem>>, vector<8x128xf32>
    tpu.vector_store %arg6[%c0_48, %c0_49], %116 {strides = array<i32>} : memref<8x128xf32, #tpu.memory_space<vmem>>, vector<8x128xf32>,
    %120 = arith.truncf %118 : vector<8x128xf32> to vector<8x128xbf16>
    %c0_50 = arith.constant 0 : index
    %c0_51 = arith.constant 0 : index
    %121 = vector.load %arg5[%c0_50, %c0_51] : memref<8x128xbf16, #tpu.memory_space<vmem>>, vector<8x128xbf16>
    tpu.vector_store %arg5[%c0_50, %c0_51], %120 {strides = array<i32>} : memref<8x128xbf16, #tpu.memory_space<vmem>>, vector<8x128xbf16>,
    %122 = arith.index_cast %c2_i32 : i32 to index
    %c0_52 = arith.constant 0 : index
    %c0_53 = arith.constant 0 : index
    %123 = vector.load %arg4[%122, %c0_52, %c0_53] : memref<8x8x128xbf16, #tpu.memory_space<vmem>>, vector<1x8x128xbf16>
    %124 = vector.shape_cast %123 : vector<1x8x128xbf16> to vector<8x128xbf16>
    %125 = vector.shape_cast %120 : vector<8x128xbf16> to vector<1x8x128xbf16>
    tpu.vector_store %arg4[%122, %c0_52, %c0_53], %125 {strides = array<i32>} : memref<8x8x128xbf16, #tpu.memory_space<vmem>>, vector<1x8x128xbf16>,
    %c3_i32 = arith.constant 3 : i32
    %c0_54 = arith.constant 0 : index
    %c0_55 = arith.constant 0 : index
    %126 = vector.load %arg5[%c0_54, %c0_55] : memref<8x128xbf16, #tpu.memory_space<vmem>>, vector<8x128xbf16>
    %c0_56 = arith.constant 0 : index
    %c0_57 = arith.constant 0 : index
    %127 = vector.load %arg6[%c0_56, %c0_57] : memref<8x128xf32, #tpu.memory_space<vmem>>, vector<8x128xf32>
    %128 = arith.index_cast %c3_i32 : i32 to index
    %c0_58 = arith.constant 0 : index
    %c0_59 = arith.constant 0 : index
    %129 = vector.load %arg2[%128, %c0_58, %c0_59] : memref<8x8x512xbf16, #tpu.memory_space<vmem>>, vector<1x8x512xbf16>
    %130 = vector.shape_cast %129 : vector<1x8x512xbf16> to vector<8x512xbf16>
    %131 = arith.extf %130 : vector<8x512xbf16> to vector<8x512xf32>
    %c0_60 = arith.constant 0 : index
    %c0_61 = arith.constant 0 : index
    %132 = vector.load %arg3[%c0_60, %c0_61] : memref<128x512xbf16, #tpu.memory_space<vmem>>, vector<128x512xbf16>
    %cst_62 = arith.constant dense<0.000000e+00> : vector<8x512xf32>
    %133 = tpu.matmul %126, %132, %cst_62 {dimension_numbers = #tpu.dot_dimension_numbers<[1], [0], [0], [1], [0, 0, 1, 1], [], []>} : vector<8x128xbf16>, vector<128x512xbf16>, vector<8x512xf32> -> vector<8x512xf32>
    %134 = arith.addf %131, %133 : vector<8x512xf32>
    %135 = vector.extract_strided_slice %134 {offsets = [0, 0], sizes = [8, 128], strides = [1, 1]} : vector<8x512xf32> to vector<8x128xf32>
    %136 = arith.negf %135 : vector<8x128xf32>
    %137 = math.exp %136 : vector<8x128xf32>
    %cst_63 = arith.constant 1.000000e+00 : f32
    %138 = vector.broadcast %cst_63 : f32 to vector<8x128xf32>
    %139 = arith.addf %138, %137 : vector<8x128xf32>
    %140 = arith.divf %138, %139 : vector<8x128xf32>
    %141 = vector.extract_strided_slice %134 {offsets = [0, 128], sizes = [8, 128], strides = [1, 1]} : vector<8x512xf32> to vector<8x128xf32>
    %142 = arith.negf %141 : vector<8x128xf32>
    %143 = math.exp %142 : vector<8x128xf32>
    %cst_64 = arith.constant 1.000000e+00 : f32
    %144 = vector.broadcast %cst_64 : f32 to vector<8x128xf32>
    %145 = arith.addf %144, %143 : vector<8x128xf32>
    %146 = arith.divf %144, %145 : vector<8x128xf32>
    %147 = vector.extract_strided_slice %134 {offsets = [0, 256], sizes = [8, 128], strides = [1, 1]} : vector<8x512xf32> to vector<8x128xf32>
    %148 = math.tanh %147 : vector<8x128xf32>
    %149 = vector.extract_strided_slice %134 {offsets = [0, 384], sizes = [8, 128], strides = [1, 1]} : vector<8x512xf32> to vector<8x128xf32>
    %150 = arith.negf %149 : vector<8x128xf32>
    %151 = math.exp %150 : vector<8x128xf32>
    %cst_65 = arith.constant 1.000000e+00 : f32
    %152 = vector.broadcast %cst_65 : f32 to vector<8x128xf32>
    %153 = arith.addf %152, %151 : vector<8x128xf32>
    %154 = arith.divf %152, %153 : vector<8x128xf32>
    %155 = arith.mulf %146, %127 : vector<8x128xf32>
    %156 = arith.mulf %140, %148 : vector<8x128xf32>
    %157 = arith.addf %155, %156 : vector<8x128xf32>
    %158 = math.tanh %157 : vector<8x128xf32>
    %159 = arith.mulf %154, %158 : vector<8x128xf32>
    %c0_66 = arith.constant 0 : index
    %c0_67 = arith.constant 0 : index
    %160 = vector.load %arg6[%c0_66, %c0_67] : memref<8x128xf32, #tpu.memory_space<vmem>>, vector<8x128xf32>
    tpu.vector_store %arg6[%c0_66, %c0_67], %157 {strides = array<i32>} : memref<8x128xf32, #tpu.memory_space<vmem>>, vector<8x128xf32>,
    %161 = arith.truncf %159 : vector<8x128xf32> to vector<8x128xbf16>
    %c0_68 = arith.constant 0 : index
    %c0_69 = arith.constant 0 : index
    %162 = vector.load %arg5[%c0_68, %c0_69] : memref<8x128xbf16, #tpu.memory_space<vmem>>, vector<8x128xbf16>
    tpu.vector_store %arg5[%c0_68, %c0_69], %161 {strides = array<i32>} : memref<8x128xbf16, #tpu.memory_space<vmem>>, vector<8x128xbf16>,
    %163 = arith.index_cast %c3_i32 : i32 to index
    %c0_70 = arith.constant 0 : index
    %c0_71 = arith.constant 0 : index
    %164 = vector.load %arg4[%163, %c0_70, %c0_71] : memref<8x8x128xbf16, #tpu.memory_space<vmem>>, vector<1x8x128xbf16>
    %165 = vector.shape_cast %164 : vector<1x8x128xbf16> to vector<8x128xbf16>
    %166 = vector.shape_cast %161 : vector<8x128xbf16> to vector<1x8x128xbf16>
    tpu.vector_store %arg4[%163, %c0_70, %c0_71], %166 {strides = array<i32>} : memref<8x8x128xbf16, #tpu.memory_space<vmem>>, vector<1x8x128xbf16>,
    %c4_i32 = arith.constant 4 : i32
    %c0_72 = arith.constant 0 : index
    %c0_73 = arith.constant 0 : index
    %167 = vector.load %arg5[%c0_72, %c0_73] : memref<8x128xbf16, #tpu.memory_space<vmem>>, vector<8x128xbf16>
    %c0_74 = arith.constant 0 : index
    %c0_75 = arith.constant 0 : index
    %168 = vector.load %arg6[%c0_74, %c0_75] : memref<8x128xf32, #tpu.memory_space<vmem>>, vector<8x128xf32>
    %169 = arith.index_cast %c4_i32 : i32 to index
    %c0_76 = arith.constant 0 : index
    %c0_77 = arith.constant 0 : index
    %170 = vector.load %arg2[%169, %c0_76, %c0_77] : memref<8x8x512xbf16, #tpu.memory_space<vmem>>, vector<1x8x512xbf16>
    %171 = vector.shape_cast %170 : vector<1x8x512xbf16> to vector<8x512xbf16>
    %172 = arith.extf %171 : vector<8x512xbf16> to vector<8x512xf32>
    %c0_78 = arith.constant 0 : index
    %c0_79 = arith.constant 0 : index
    %173 = vector.load %arg3[%c0_78, %c0_79] : memref<128x512xbf16, #tpu.memory_space<vmem>>, vector<128x512xbf16>
    %cst_80 = arith.constant dense<0.000000e+00> : vector<8x512xf32>
    %174 = tpu.matmul %167, %173, %cst_80 {dimension_numbers = #tpu.dot_dimension_numbers<[1], [0], [0], [1], [0, 0, 1, 1], [], []>} : vector<8x128xbf16>, vector<128x512xbf16>, vector<8x512xf32> -> vector<8x512xf32>
    %175 = arith.addf %172, %174 : vector<8x512xf32>
    %176 = vector.extract_strided_slice %175 {offsets = [0, 0], sizes = [8, 128], strides = [1, 1]} : vector<8x512xf32> to vector<8x128xf32>
    %177 = arith.negf %176 : vector<8x128xf32>
    %178 = math.exp %177 : vector<8x128xf32>
    %cst_81 = arith.constant 1.000000e+00 : f32
    %179 = vector.broadcast %cst_81 : f32 to vector<8x128xf32>
    %180 = arith.addf %179, %178 : vector<8x128xf32>
    %181 = arith.divf %179, %180 : vector<8x128xf32>
    %182 = vector.extract_strided_slice %175 {offsets = [0, 128], sizes = [8, 128], strides = [1, 1]} : vector<8x512xf32> to vector<8x128xf32>
    %183 = arith.negf %182 : vector<8x128xf32>
    %184 = math.exp %183 : vector<8x128xf32>
    %cst_82 = arith.constant 1.000000e+00 : f32
    %185 = vector.broadcast %cst_82 : f32 to vector<8x128xf32>
    %186 = arith.addf %185, %184 : vector<8x128xf32>
    %187 = arith.divf %185, %186 : vector<8x128xf32>
    %188 = vector.extract_strided_slice %175 {offsets = [0, 256], sizes = [8, 128], strides = [1, 1]} : vector<8x512xf32> to vector<8x128xf32>
    %189 = math.tanh %188 : vector<8x128xf32>
    %190 = vector.extract_strided_slice %175 {offsets = [0, 384], sizes = [8, 128], strides = [1, 1]} : vector<8x512xf32> to vector<8x128xf32>
    %191 = arith.negf %190 : vector<8x128xf32>
    %192 = math.exp %191 : vector<8x128xf32>
    %cst_83 = arith.constant 1.000000e+00 : f32
    %193 = vector.broadcast %cst_83 : f32 to vector<8x128xf32>
    %194 = arith.addf %193, %192 : vector<8x128xf32>
    %195 = arith.divf %193, %194 : vector<8x128xf32>
    %196 = arith.mulf %187, %168 : vector<8x128xf32>
    %197 = arith.mulf %181, %189 : vector<8x128xf32>
    %198 = arith.addf %196, %197 : vector<8x128xf32>
    %199 = math.tanh %198 : vector<8x128xf32>
    %200 = arith.mulf %195, %199 : vector<8x128xf32>
    %c0_84 = arith.constant 0 : index
    %c0_85 = arith.constant 0 : index
    %201 = vector.load %arg6[%c0_84, %c0_85] : memref<8x128xf32, #tpu.memory_space<vmem>>, vector<8x128xf32>
    tpu.vector_store %arg6[%c0_84, %c0_85], %198 {strides = array<i32>} : memref<8x128xf32, #tpu.memory_space<vmem>>, vector<8x128xf32>,
    %202 = arith.truncf %200 : vector<8x128xf32> to vector<8x128xbf16>
    %c0_86 = arith.constant 0 : index
    %c0_87 = arith.constant 0 : index
    %203 = vector.load %arg5[%c0_86, %c0_87] : memref<8x128xbf16, #tpu.memory_space<vmem>>, vector<8x128xbf16>
    tpu.vector_store %arg5[%c0_86, %c0_87], %202 {strides = array<i32>} : memref<8x128xbf16, #tpu.memory_space<vmem>>, vector<8x128xbf16>,
    %204 = arith.index_cast %c4_i32 : i32 to index
    %c0_88 = arith.constant 0 : index
    %c0_89 = arith.constant 0 : index
    %205 = vector.load %arg4[%204, %c0_88, %c0_89] : memref<8x8x128xbf16, #tpu.memory_space<vmem>>, vector<1x8x128xbf16>
    %206 = vector.shape_cast %205 : vector<1x8x128xbf16> to vector<8x128xbf16>
    %207 = vector.shape_cast %202 : vector<8x128xbf16> to vector<1x8x128xbf16>
    tpu.vector_store %arg4[%204, %c0_88, %c0_89], %207 {strides = array<i32>} : memref<8x8x128xbf16, #tpu.memory_space<vmem>>, vector<1x8x128xbf16>,
    %c5_i32 = arith.constant 5 : i32
    %c0_90 = arith.constant 0 : index
    %c0_91 = arith.constant 0 : index
    %208 = vector.load %arg5[%c0_90, %c0_91] : memref<8x128xbf16, #tpu.memory_space<vmem>>, vector<8x128xbf16>
    %c0_92 = arith.constant 0 : index
    %c0_93 = arith.constant 0 : index
    %209 = vector.load %arg6[%c0_92, %c0_93] : memref<8x128xf32, #tpu.memory_space<vmem>>, vector<8x128xf32>
    %210 = arith.index_cast %c5_i32 : i32 to index
    %c0_94 = arith.constant 0 : index
    %c0_95 = arith.constant 0 : index
    %211 = vector.load %arg2[%210, %c0_94, %c0_95] : memref<8x8x512xbf16, #tpu.memory_space<vmem>>, vector<1x8x512xbf16>
    %212 = vector.shape_cast %211 : vector<1x8x512xbf16> to vector<8x512xbf16>
    %213 = arith.extf %212 : vector<8x512xbf16> to vector<8x512xf32>
    %c0_96 = arith.constant 0 : index
    %c0_97 = arith.constant 0 : index
    %214 = vector.load %arg3[%c0_96, %c0_97] : memref<128x512xbf16, #tpu.memory_space<vmem>>, vector<128x512xbf16>
    %cst_98 = arith.constant dense<0.000000e+00> : vector<8x512xf32>
    %215 = tpu.matmul %208, %214, %cst_98 {dimension_numbers = #tpu.dot_dimension_numbers<[1], [0], [0], [1], [0, 0, 1, 1], [], []>} : vector<8x128xbf16>, vector<128x512xbf16>, vector<8x512xf32> -> vector<8x512xf32>
    %216 = arith.addf %213, %215 : vector<8x512xf32>
    %217 = vector.extract_strided_slice %216 {offsets = [0, 0], sizes = [8, 128], strides = [1, 1]} : vector<8x512xf32> to vector<8x128xf32>
    %218 = arith.negf %217 : vector<8x128xf32>
    %219 = math.exp %218 : vector<8x128xf32>
    %cst_99 = arith.constant 1.000000e+00 : f32
    %220 = vector.broadcast %cst_99 : f32 to vector<8x128xf32>
    %221 = arith.addf %220, %219 : vector<8x128xf32>
    %222 = arith.divf %220, %221 : vector<8x128xf32>
    %223 = vector.extract_strided_slice %216 {offsets = [0, 128], sizes = [8, 128], strides = [1, 1]} : vector<8x512xf32> to vector<8x128xf32>
    %224 = arith.negf %223 : vector<8x128xf32>
    %225 = math.exp %224 : vector<8x128xf32>
    %cst_100 = arith.constant 1.000000e+00 : f32
    %226 = vector.broadcast %cst_100 : f32 to vector<8x128xf32>
    %227 = arith.addf %226, %225 : vector<8x128xf32>
    %228 = arith.divf %226, %227 : vector<8x128xf32>
    %229 = vector.extract_strided_slice %216 {offsets = [0, 256], sizes = [8, 128], strides = [1, 1]} : vector<8x512xf32> to vector<8x128xf32>
    %230 = math.tanh %229 : vector<8x128xf32>
    %231 = vector.extract_strided_slice %216 {offsets = [0, 384], sizes = [8, 128], strides = [1, 1]} : vector<8x512xf32> to vector<8x128xf32>
    %232 = arith.negf %231 : vector<8x128xf32>
    %233 = math.exp %232 : vector<8x128xf32>
    %cst_101 = arith.constant 1.000000e+00 : f32
    %234 = vector.broadcast %cst_101 : f32 to vector<8x128xf32>
    %235 = arith.addf %234, %233 : vector<8x128xf32>
    %236 = arith.divf %234, %235 : vector<8x128xf32>
    %237 = arith.mulf %228, %209 : vector<8x128xf32>
    %238 = arith.mulf %222, %230 : vector<8x128xf32>
    %239 = arith.addf %237, %238 : vector<8x128xf32>
    %240 = math.tanh %239 : vector<8x128xf32>
    %241 = arith.mulf %236, %240 : vector<8x128xf32>
    %c0_102 = arith.constant 0 : index
    %c0_103 = arith.constant 0 : index
    %242 = vector.load %arg6[%c0_102, %c0_103] : memref<8x128xf32, #tpu.memory_space<vmem>>, vector<8x128xf32>
    tpu.vector_store %arg6[%c0_102, %c0_103], %239 {strides = array<i32>} : memref<8x128xf32, #tpu.memory_space<vmem>>, vector<8x128xf32>,
    %243 = arith.truncf %241 : vector<8x128xf32> to vector<8x128xbf16>
    %c0_104 = arith.constant 0 : index
    %c0_105 = arith.constant 0 : index
    %244 = vector.load %arg5[%c0_104, %c0_105] : memref<8x128xbf16, #tpu.memory_space<vmem>>, vector<8x128xbf16>
    tpu.vector_store %arg5[%c0_104, %c0_105], %243 {strides = array<i32>} : memref<8x128xbf16, #tpu.memory_space<vmem>>, vector<8x128xbf16>,
    %245 = arith.index_cast %c5_i32 : i32 to index
    %c0_106 = arith.constant 0 : index
    %c0_107 = arith.constant 0 : index
    %246 = vector.load %arg4[%245, %c0_106, %c0_107] : memref<8x8x128xbf16, #tpu.memory_space<vmem>>, vector<1x8x128xbf16>
    %247 = vector.shape_cast %246 : vector<1x8x128xbf16> to vector<8x128xbf16>
    %248 = vector.shape_cast %243 : vector<8x128xbf16> to vector<1x8x128xbf16>
    tpu.vector_store %arg4[%245, %c0_106, %c0_107], %248 {strides = array<i32>} : memref<8x8x128xbf16, #tpu.memory_space<vmem>>, vector<1x8x128xbf16>,
    %c6_i32 = arith.constant 6 : i32
    %c0_108 = arith.constant 0 : index
    %c0_109 = arith.constant 0 : index
    %249 = vector.load %arg5[%c0_108, %c0_109] : memref<8x128xbf16, #tpu.memory_space<vmem>>, vector<8x128xbf16>
    %c0_110 = arith.constant 0 : index
    %c0_111 = arith.constant 0 : index
    %250 = vector.load %arg6[%c0_110, %c0_111] : memref<8x128xf32, #tpu.memory_space<vmem>>, vector<8x128xf32>
    %251 = arith.index_cast %c6_i32 : i32 to index
    %c0_112 = arith.constant 0 : index
    %c0_113 = arith.constant 0 : index
    %252 = vector.load %arg2[%251, %c0_112, %c0_113] : memref<8x8x512xbf16, #tpu.memory_space<vmem>>, vector<1x8x512xbf16>
    %253 = vector.shape_cast %252 : vector<1x8x512xbf16> to vector<8x512xbf16>
    %254 = arith.extf %253 : vector<8x512xbf16> to vector<8x512xf32>
    %c0_114 = arith.constant 0 : index
    %c0_115 = arith.constant 0 : index
    %255 = vector.load %arg3[%c0_114, %c0_115] : memref<128x512xbf16, #tpu.memory_space<vmem>>, vector<128x512xbf16>
    %cst_116 = arith.constant dense<0.000000e+00> : vector<8x512xf32>
    %256 = tpu.matmul %249, %255, %cst_116 {dimension_numbers = #tpu.dot_dimension_numbers<[1], [0], [0], [1], [0, 0, 1, 1], [], []>} : vector<8x128xbf16>, vector<128x512xbf16>, vector<8x512xf32> -> vector<8x512xf32>
    %257 = arith.addf %254, %256 : vector<8x512xf32>
    %258 = vector.extract_strided_slice %257 {offsets = [0, 0], sizes = [8, 128], strides = [1, 1]} : vector<8x512xf32> to vector<8x128xf32>
    %259 = arith.negf %258 : vector<8x128xf32>
    %260 = math.exp %259 : vector<8x128xf32>
    %cst_117 = arith.constant 1.000000e+00 : f32
    %261 = vector.broadcast %cst_117 : f32 to vector<8x128xf32>
    %262 = arith.addf %261, %260 : vector<8x128xf32>
    %263 = arith.divf %261, %262 : vector<8x128xf32>
    %264 = vector.extract_strided_slice %257 {offsets = [0, 128], sizes = [8, 128], strides = [1, 1]} : vector<8x512xf32> to vector<8x128xf32>
    %265 = arith.negf %264 : vector<8x128xf32>
    %266 = math.exp %265 : vector<8x128xf32>
    %cst_118 = arith.constant 1.000000e+00 : f32
    %267 = vector.broadcast %cst_118 : f32 to vector<8x128xf32>
    %268 = arith.addf %267, %266 : vector<8x128xf32>
    %269 = arith.divf %267, %268 : vector<8x128xf32>
    %270 = vector.extract_strided_slice %257 {offsets = [0, 256], sizes = [8, 128], strides = [1, 1]} : vector<8x512xf32> to vector<8x128xf32>
    %271 = math.tanh %270 : vector<8x128xf32>
    %272 = vector.extract_strided_slice %257 {offsets = [0, 384], sizes = [8, 128], strides = [1, 1]} : vector<8x512xf32> to vector<8x128xf32>
    %273 = arith.negf %272 : vector<8x128xf32>
    %274 = math.exp %273 : vector<8x128xf32>
    %cst_119 = arith.constant 1.000000e+00 : f32
    %275 = vector.broadcast %cst_119 : f32 to vector<8x128xf32>
    %276 = arith.addf %275, %274 : vector<8x128xf32>
    %277 = arith.divf %275, %276 : vector<8x128xf32>
    %278 = arith.mulf %269, %250 : vector<8x128xf32>
    %279 = arith.mulf %263, %271 : vector<8x128xf32>
    %280 = arith.addf %278, %279 : vector<8x128xf32>
    %281 = math.tanh %280 : vector<8x128xf32>
    %282 = arith.mulf %277, %281 : vector<8x128xf32>
    %c0_120 = arith.constant 0 : index
    %c0_121 = arith.constant 0 : index
    %283 = vector.load %arg6[%c0_120, %c0_121] : memref<8x128xf32, #tpu.memory_space<vmem>>, vector<8x128xf32>
    tpu.vector_store %arg6[%c0_120, %c0_121], %280 {strides = array<i32>} : memref<8x128xf32, #tpu.memory_space<vmem>>, vector<8x128xf32>,
    %284 = arith.truncf %282 : vector<8x128xf32> to vector<8x128xbf16>
    %c0_122 = arith.constant 0 : index
    %c0_123 = arith.constant 0 : index
    %285 = vector.load %arg5[%c0_122, %c0_123] : memref<8x128xbf16, #tpu.memory_space<vmem>>, vector<8x128xbf16>
    tpu.vector_store %arg5[%c0_122, %c0_123], %284 {strides = array<i32>} : memref<8x128xbf16, #tpu.memory_space<vmem>>, vector<8x128xbf16>,
    %286 = arith.index_cast %c6_i32 : i32 to index
    %c0_124 = arith.constant 0 : index
    %c0_125 = arith.constant 0 : index
    %287 = vector.load %arg4[%286, %c0_124, %c0_125] : memref<8x8x128xbf16, #tpu.memory_space<vmem>>, vector<1x8x128xbf16>
    %288 = vector.shape_cast %287 : vector<1x8x128xbf16> to vector<8x128xbf16>
    %289 = vector.shape_cast %284 : vector<8x128xbf16> to vector<1x8x128xbf16>
    tpu.vector_store %arg4[%286, %c0_124, %c0_125], %289 {strides = array<i32>} : memref<8x8x128xbf16, #tpu.memory_space<vmem>>, vector<1x8x128xbf16>,
    %c7_i32 = arith.constant 7 : i32
    %c0_126 = arith.constant 0 : index
    %c0_127 = arith.constant 0 : index
    %290 = vector.load %arg5[%c0_126, %c0_127] : memref<8x128xbf16, #tpu.memory_space<vmem>>, vector<8x128xbf16>
    %c0_128 = arith.constant 0 : index
    %c0_129 = arith.constant 0 : index
    %291 = vector.load %arg6[%c0_128, %c0_129] : memref<8x128xf32, #tpu.memory_space<vmem>>, vector<8x128xf32>
    %292 = arith.index_cast %c7_i32 : i32 to index
    %c0_130 = arith.constant 0 : index
    %c0_131 = arith.constant 0 : index
    %293 = vector.load %arg2[%292, %c0_130, %c0_131] : memref<8x8x512xbf16, #tpu.memory_space<vmem>>, vector<1x8x512xbf16>
    %294 = vector.shape_cast %293 : vector<1x8x512xbf16> to vector<8x512xbf16>
    %295 = arith.extf %294 : vector<8x512xbf16> to vector<8x512xf32>
    %c0_132 = arith.constant 0 : index
    %c0_133 = arith.constant 0 : index
    %296 = vector.load %arg3[%c0_132, %c0_133] : memref<128x512xbf16, #tpu.memory_space<vmem>>, vector<128x512xbf16>
    %cst_134 = arith.constant dense<0.000000e+00> : vector<8x512xf32>
    %297 = tpu.matmul %290, %296, %cst_134 {dimension_numbers = #tpu.dot_dimension_numbers<[1], [0], [0], [1], [0, 0, 1, 1], [], []>} : vector<8x128xbf16>, vector<128x512xbf16>, vector<8x512xf32> -> vector<8x512xf32>
    %298 = arith.addf %295, %297 : vector<8x512xf32>
    %299 = vector.extract_strided_slice %298 {offsets = [0, 0], sizes = [8, 128], strides = [1, 1]} : vector<8x512xf32> to vector<8x128xf32>
    %300 = arith.negf %299 : vector<8x128xf32>
    %301 = math.exp %300 : vector<8x128xf32>
    %cst_135 = arith.constant 1.000000e+00 : f32
    %302 = vector.broadcast %cst_135 : f32 to vector<8x128xf32>
    %303 = arith.addf %302, %301 : vector<8x128xf32>
    %304 = arith.divf %302, %303 : vector<8x128xf32>
    %305 = vector.extract_strided_slice %298 {offsets = [0, 128], sizes = [8, 128], strides = [1, 1]} : vector<8x512xf32> to vector<8x128xf32>
    %306 = arith.negf %305 : vector<8x128xf32>
    %307 = math.exp %306 : vector<8x128xf32>
    %cst_136 = arith.constant 1.000000e+00 : f32
    %308 = vector.broadcast %cst_136 : f32 to vector<8x128xf32>
    %309 = arith.addf %308, %307 : vector<8x128xf32>
    %310 = arith.divf %308, %309 : vector<8x128xf32>
    %311 = vector.extract_strided_slice %298 {offsets = [0, 256], sizes = [8, 128], strides = [1, 1]} : vector<8x512xf32> to vector<8x128xf32>
    %312 = math.tanh %311 : vector<8x128xf32>
    %313 = vector.extract_strided_slice %298 {offsets = [0, 384], sizes = [8, 128], strides = [1, 1]} : vector<8x512xf32> to vector<8x128xf32>
    %314 = arith.negf %313 : vector<8x128xf32>
    %315 = math.exp %314 : vector<8x128xf32>
    %cst_137 = arith.constant 1.000000e+00 : f32
    %316 = vector.broadcast %cst_137 : f32 to vector<8x128xf32>
    %317 = arith.addf %316, %315 : vector<8x128xf32>
    %318 = arith.divf %316, %317 : vector<8x128xf32>
    %319 = arith.mulf %310, %291 : vector<8x128xf32>
    %320 = arith.mulf %304, %312 : vector<8x128xf32>
    %321 = arith.addf %319, %320 : vector<8x128xf32>
    %322 = math.tanh %321 : vector<8x128xf32>
    %323 = arith.mulf %318, %322 : vector<8x128xf32>
    %c0_138 = arith.constant 0 : index
    %c0_139 = arith.constant 0 : index
    %324 = vector.load %arg6[%c0_138, %c0_139] : memref<8x128xf32, #tpu.memory_space<vmem>>, vector<8x128xf32>
    tpu.vector_store %arg6[%c0_138, %c0_139], %321 {strides = array<i32>} : memref<8x128xf32, #tpu.memory_space<vmem>>, vector<8x128xf32>,
    %325 = arith.truncf %323 : vector<8x128xf32> to vector<8x128xbf16>
    %c0_140 = arith.constant 0 : index
    %c0_141 = arith.constant 0 : index
    %326 = vector.load %arg5[%c0_140, %c0_141] : memref<8x128xbf16, #tpu.memory_space<vmem>>, vector<8x128xbf16>
    tpu.vector_store %arg5[%c0_140, %c0_141], %325 {strides = array<i32>} : memref<8x128xbf16, #tpu.memory_space<vmem>>, vector<8x128xbf16>,
    %327 = arith.index_cast %c7_i32 : i32 to index
    %c0_142 = arith.constant 0 : index
    %c0_143 = arith.constant 0 : index
    %328 = vector.load %arg4[%327, %c0_142, %c0_143] : memref<8x8x128xbf16, #tpu.memory_space<vmem>>, vector<1x8x128xbf16>
    %329 = vector.shape_cast %328 : vector<1x8x128xbf16> to vector<8x128xbf16>
    %330 = vector.shape_cast %325 : vector<8x128xbf16> to vector<1x8x128xbf16>
    tpu.vector_store %arg4[%327, %c0_142, %c0_143], %330 {strides = array<i32>} : memref<8x8x128xbf16, #tpu.memory_space<vmem>>, vector<1x8x128xbf16>,
    %c8_i32 = arith.constant 8 : i32
    return
  }
  func.func @transform_0(%arg0: i32, %arg1: i32) -> (i32, i32, i32) {
    %c0_i32 = arith.constant 0 : i32
    %c0_i32_0 = arith.constant 0 : i32
    return %arg1, %arg0, %c0_i32 : i32, i32, i32
  }
  func.func @transform_1(%arg0: i32, %arg1: i32) -> (i32, i32) {
    %c0_i32 = arith.constant 0 : i32
    %c0_i32_0 = arith.constant 0 : i32
    %c0_i32_1 = arith.constant 0 : i32
    return %c0_i32, %c0_i32_0 : i32, i32
  }
  func.func @transform_2(%arg0: i32, %arg1: i32) -> (i32, i32, i32) {
    %c0_i32 = arith.constant 0 : i32
    %c0_i32_0 = arith.constant 0 : i32
    return %arg1, %arg0, %c0_i32 : i32, i32, i32
  }
}

</mosaic_0001>

<llo_original>
// kernel: tpu_custom_call.1
$region0: #{tpu_custom_call.1}
  #allocation0 [shape = 'u32[]', space=smem, size = 0x4, offset = 0x4, fixed_abs, tag = 'smem constant byte address 0x4 - core index']
  #allocation1 [shape = 'u32[144,128]{1,0:T(1,128)}', space=vmem, size = 0x12000, scoped, tag = 'internal scratch']
  #allocation2 [shape = 'bf16[8,128]{1,0:T(8,128)(2,1)}', space=vmem, size = 0x800, scoped, tag = 'scratch operand']
  #allocation3 [shape = 'f32[8,128]{1,0:T(8,128)}', space=vmem, size = 0x1000, scoped, tag = 'scratch operand']
  %s0 = inlined_call_operand.hbm [shape: bf16[8,8,512], index: 0, kind: input, shape index: {}]
  %s1 = inlined_call_operand.hbm [shape: bf16[128,512], index: 1, kind: input, shape index: {}]
  %s2 = inlined_call_operand.hbm [shape: bf16[8,8,128], index: 2, kind: output, shape index: {}]
  %s3 = sld [smem:[#allocation0]]
  $region30: #{tpu_custom_call.1} parent=0
    _
  %s5 = ssub.s32 1, %s3
  %s6 = scalar_select 0, %s5, %s3
  $region1: #{tpu_custom_call.1} parent=0
    #allocation4 [shape = 'u8[65536]{0}', space=vmem, size = 0x10000, scoped, tag = 'input window, operand 0, single buffered']
    #allocation5 [shape = 's32[1]{0}', space=sflag, size = 0x4, scoped, tag = 'scoped memory for tpu_custom_call.1']
    #allocation6 [shape = 's32[1]{0}', space=sflag, size = 0x4, scoped, tag = 'scoped memory for tpu_custom_call.1']
    #allocation7 [shape = 'u8[131072]{0}', space=vmem, size = 0x20000, scoped, tag = 'input window, operand 1, single buffered']
    #allocation8 [shape = 's32[1]{0}', space=sflag, size = 0x4, scoped, tag = 'scoped memory for tpu_custom_call.1']
    #allocation9 [shape = 'u8[16384]{0}', space=vmem, size = 0x4000, scoped, tag = 'output window, operand 0, single buffered']
    %7 = vsyncpa [#allocation5], 0
    %8 = vsyncpa [#allocation8], 0
    %9 = vsyncpa [#allocation6], 0
    // Predicated region
    $region2: #{tpu_custom_call.1} parent=1 // pred_check
      _
    $region3: #{tpu_custom_call.1} parent=1 // pred_check_branch
      %11 = sbr.rel (0) target = $region5
    $region4: #{tpu_custom_call.1} parent=1 // pred_region
      %s13 = ssub.s32 2048, 2048
      %14 = vsyncadd [#allocation5], %s13
      %s15 = sshll.u32 [#allocation4], 4
      %s16 = int_to_ptr.vmem [resolvable:$true] %s15
      %21 = dma.hbm_to_vmem [thread:$0]  %s0, 2048, %s16, [#allocation5], 256, 256, 16
    $region5: #{tpu_custom_call.1} parent=1 // pred_fallthru
      _
    // Predicated region
    $region6: #{tpu_custom_call.1} parent=1 // pred_check
      _
    $region7: #{tpu_custom_call.1} parent=1 // pred_check_branch
      %23 = sbr.rel (0) target = $region9
    $region8: #{tpu_custom_call.1} parent=1 // pred_region
      %s25 = ssub.s32 4096, 4096
      %26 = vsyncadd [#allocation8], %s25
      %s27 = sshll.u32 [#allocation7], 4
      %s28 = int_to_ptr.vmem [resolvable:$true] %s27
      %33 = dma.hbm_to_vmem [thread:$0]  %s1, 4096, %s28, [#allocation8], 256, 256, 16
    $region9: #{tpu_custom_call.1} parent=1 // pred_fallthru
      _
    // Predicated region
    $region10: #{tpu_custom_call.1} parent=1 // pred_check
      _
    $region11: #{tpu_custom_call.1} parent=1 // pred_check_branch
      %35 = sbr.rel (0) target = $region13
    $region12: #{tpu_custom_call.1} parent=1 // pred_region
      %36 = dma.done [#allocation5], 2048
    $region13: #{tpu_custom_call.1} parent=1 // pred_fallthru
      _
    // Predicated region
    $region14: #{tpu_custom_call.1} parent=1 // pred_check
      _
    $region15: #{tpu_custom_call.1} parent=1 // pred_check_branch
      %38 = sbr.rel (0) target = $region17
    $region16: #{tpu_custom_call.1} parent=1 // pred_region
      %39 = dma.done [#allocation8], 4096
    $region17: #{tpu_custom_call.1} parent=1 // pred_fallthru
      _
    %p41 = scmp.eq.s32.totalorder 0, 0
    // Predicated region
    $region18: #{tpu_custom_call.1} parent=1 // pred_check
      %p42 = pneg %p41
    $region19: #{tpu_custom_call.1} parent=1 // pred_check_branch
      %44 = sbr.rel (%p42) target = $region21
    $region20: #{tpu_custom_call.1} parent=1 // pred_region
      %45 = vst [vmem:[#allocation2] sm:$0xf] 0
      %46 = vst [vmem:[#allocation3] sm:$0xff] 0.0
    $region21: #{tpu_custom_call.1} parent=1 // pred_fallthru
      _
    %v47 = vld [vmem:[#allocation2] sm:$0xf]
    %v48 = vld [vmem:[#allocation3] sm:$0xff]
    %v49 = vld [vmem:[#allocation4] sm:$0xff]
    %v50 = vld [vmem:[#allocation4 + $0x8] sm:$0xff]
    %v51 = vunpack.c.l.bf16 %v49
    %v52 = vunpack.c.h.bf16 %v49
    %v53 = vunpack.c.l.bf16 %v50
    %v54 = vunpack.c.h.bf16 %v50
    %v55 = vld [vmem:[#allocation7] sm:$0xff]
    %v56 = vld [vmem:[#allocation7 + $0x8] sm:$0xff]
    %v57 = vld [vmem:[#allocation7 + $0x10] sm:$0xff]
    %v58 = vld [vmem:[#allocation7 + $0x18] sm:$0xff]
    %v59 = vld [vmem:[#allocation7 + $0x20] sm:$0xff]
    %v60 = vld [vmem:[#allocation7 + $0x28] sm:$0xff]
    %v61 = vld [vmem:[#allocation7 + $0x30] sm:$0xff]
    %v62 = vld [vmem:[#allocation7 + $0x38] sm:$0xff]
    %v63 = vld [vmem:[#allocation7 + $0x40] sm:$0xff]
    %v64 = vld [vmem:[#allocation7 + $0x48] sm:$0xff]
    %v65 = vld [vmem:[#allocation7 + $0x50] sm:$0xff]
    %v66 = vld [vmem:[#allocation7 + $0x58] sm:$0xff]
    %v67 = vld [vmem:[#allocation7 + $0x60] sm:$0xff]
    %v68 = vld [vmem:[#allocation7 + $0x68] sm:$0xff]
    %v69 = vld [vmem:[#allocation7 + $0x70] sm:$0xff]
    %v70 = vld [vmem:[#allocation7 + $0x78] sm:$0xff]
    %v71 = vld [vmem:[#allocation7 + $0x80] sm:$0xff]
    %v72 = vld [vmem:[#allocation7 + $0x88] sm:$0xff]
    %v73 = vld [vmem:[#allocation7 + $0x90] sm:$0xff]
    %v74 = vld [vmem:[#allocation7 + $0x98] sm:$0xff]
    %v75 = vld [vmem:[#allocation7 + $0xa0] sm:$0xff]
    %v76 = vld [vmem:[#allocation7 + $0xa8] sm:$0xff]
    %v77 = vld [vmem:[#allocation7 + $0xb0] sm:$0xff]
    %v78 = vld [vmem:[#allocation7 + $0xb8] sm:$0xff]
    %v79 = vld [vmem:[#allocation7 + $0xc0] sm:$0xff]
    %v80 = vld [vmem:[#allocation7 + $0xc8] sm:$0xff]
    %v81 = vld [vmem:[#allocation7 + $0xd0] sm:$0xff]
    %v82 = vld [vmem:[#allocation7 + $0xd8] sm:$0xff]
    %v83 = vld [vmem:[#allocation7 + $0xe0] sm:$0xff]
    %v84 = vld [vmem:[#allocation7 + $0xe8] sm:$0xff]
    %v85 = vld [vmem:[#allocation7 + $0xf0] sm:$0xff]
    %v86 = vld [vmem:[#allocation7 + $0xf8] sm:$0xff]
    %v119 = vunpack.c.l.b16 %v55
    %v120 = vunpack.c.h.b16 %v55
    %v121 = vunpack.c.l.b16 %v56
    %v122 = vunpack.c.h.b16 %v56
    %v123 = vunpack.c.l.b16 %v57
    %v124 = vunpack.c.h.b16 %v57
    %v125 = vunpack.c.l.b16 %v58
    %v126 = vunpack.c.h.b16 %v58
    %v127 = vunpack.c.l.b16 %v59
    %v128 = vunpack.c.h.b16 %v59
    %v129 = vunpack.c.l.b16 %v60
    %v130 = vunpack.c.h.b16 %v60
    %v131 = vunpack.c.l.b16 %v61
    %v132 = vunpack.c.h.b16 %v61
    %v133 = vunpack.c.l.b16 %v62
    %v134 = vunpack.c.h.b16 %v62
    %v135 = vunpack.c.l.b16 %v63
    %v136 = vunpack.c.h.b16 %v63
    %v137 = vunpack.c.l.b16 %v64
    %v138 = vunpack.c.h.b16 %v64
    %v139 = vunpack.c.l.b16 %v65
    %v140 = vunpack.c.h.b16 %v65
    %v141 = vunpack.c.l.b16 %v66
    %v142 = vunpack.c.h.b16 %v66
    %v143 = vunpack.c.l.b16 %v67
    %v144 = vunpack.c.h.b16 %v67
    %v145 = vunpack.c.l.b16 %v68
    %v146 = vunpack.c.h.b16 %v68
    %v147 = vunpack.c.l.b16 %v69
    %v148 = vunpack.c.h.b16 %v69
    %v149 = vunpack.c.l.b16 %v70
    %v150 = vunpack.c.h.b16 %v70
    %v151 = vunpack.c.l.b16 %v71
    %v152 = vunpack.c.h.b16 %v71
    %v153 = vunpack.c.l.b16 %v72
    %v154 = vunpack.c.h.b16 %v72
    %v155 = vunpack.c.l.b16 %v73
    %v156 = vunpack.c.h.b16 %v73
    %v157 = vunpack.c.l.b16 %v74
    %v158 = vunpack.c.h.b16 %v74
    %v159 = vunpack.c.l.b16 %v75
    %v160 = vunpack.c.h.b16 %v75
    %v161 = vunpack.c.l.b16 %v76
    %v162 = vunpack.c.h.b16 %v76
    %v163 = vunpack.c.l.b16 %v77
    %v164 = vunpack.c.h.b16 %v77
    %v165 = vunpack.c.l.b16 %v78
    %v166 = vunpack.c.h.b16 %v78
    %v167 = vunpack.c.l.b16 %v79
    %v168 = vunpack.c.h.b16 %v79
    %v169 = vunpack.c.l.b16 %v80
    %v170 = vunpack.c.h.b16 %v80
    %v171 = vunpack.c.l.b16 %v81
    %v172 = vunpack.c.h.b16 %v81
    %v173 = vunpack.c.l.b16 %v82
    %v174 = vunpack.c.h.b16 %v82
    %v175 = vunpack.c.l.b16 %v83
    %v176 = vunpack.c.h.b16 %v83
    %v177 = vunpack.c.l.b16 %v84
    %v178 = vunpack.c.h.b16 %v84
    %v179 = vunpack.c.l.b16 %v85
    %v180 = vunpack.c.h.b16 %v85
    %v181 = vunpack.c.l.b16 %v86
    %v182 = vunpack.c.h.b16 %v86
    %v183 = vpack.c.b16 %v123, %v119
    %v184 = vpack.c.b16 %v124, %v120
    %v185 = vpack.c.b16 %v125, %v121
    %v186 = vpack.c.b16 %v126, %v122
    %v187 = vpack.c.b16 %v131, %v127
    %v188 = vpack.c.b16 %v132, %v128
    %v189 = vpack.c.b16 %v133, %v129
    %v190 = vpack.c.b16 %v134, %v130
    %v191 = vpack.c.b16 %v139, %v135
    %v192 = vpack.c.b16 %v140, %v136
    %v193 = vpack.c.b16 %v141, %v137
    %v194 = vpack.c.b16 %v142, %v138
    %v195 = vpack.c.b16 %v147, %v143
    %v196 = vpack.c.b16 %v148, %v144
    %v197 = vpack.c.b16 %v149, %v145
    %v198 = vpack.c.b16 %v150, %v146
    %v199 = vpack.c.b16 %v155, %v151
    %v200 = vpack.c.b16 %v156, %v152
    %v201 = vpack.c.b16 %v157, %v153
    %v202 = vpack.c.b16 %v158, %v154
    %v203 = vpack.c.b16 %v163, %v159
    %v204 = vpack.c.b16 %v164, %v160
    %v205 = vpack.c.b16 %v165, %v161
    %v206 = vpack.c.b16 %v166, %v162
    %v207 = vpack.c.b16 %v171, %v167
    %v208 = vpack.c.b16 %v172, %v168
    %v209 = vpack.c.b16 %v173, %v169
    %v210 = vpack.c.b16 %v174, %v170
    %v211 = vpack.c.b16 %v179, %v175
    %v212 = vpack.c.b16 %v180, %v176
    %v213 = vpack.c.b16 %v181, %v177
    %v214 = vpack.c.b16 %v182, %v178
    %247 = vmatprep.subr.bf16.mxu0 %v212
    %248 = vmatpush1.bf16.msra.mxu0 %v211
    %249 = vmatprep.subr.bf16.mxu0 %v208
    %250 = vmatpush1.bf16.msra.mxu0 %v207
    %251 = vmatprep.subr.bf16.mxu0 %v204
    %252 = vmatpush1.bf16.msra.mxu0 %v203
    %253 = vmatprep.subr.bf16.mxu0 %v200
    %254 = vmatpush1.bf16.msra.mxu0 %v199
    %255 = vmatprep.subr.bf16.mxu0 %v196
    %256 = vmatpush1.bf16.msra.mxu0 %v195
    %257 = vmatprep.subr.bf16.mxu0 %v192
    %258 = vmatpush1.bf16.msra.mxu0 %v191
    %259 = vmatprep.subr.bf16.mxu0 %v188
    %260 = vmatpush1.bf16.msra.mxu0 %v187
    %261 = vmatprep.subr.bf16.mxu0 %v184
    %262 = vmatpush1.bf16.msra.mxu0 %v183
    %263 = vmatprep.subr.bf16.mxu0 0
    %264 = vmatpush2.bf16.msra.mxu0 0
    %265 = vmatprep.subr.bf16.mxu0 0
    %266 = vmatpush2.bf16.msra.mxu0 0
    %267 = vmatprep.subr.bf16.mxu0 0
    %268 = vmatpush2.bf16.msra.mxu0 0
    %269 = vmatprep.subr.bf16.mxu0 0
    %270 = vmatpush2.bf16.msra.mxu0 0
    %271 = vmatprep.subr.bf16.mxu0 0
    %272 = vmatpush2.bf16.msra.mxu0 0
    %273 = vmatprep.subr.bf16.mxu0 0
    %274 = vmatpush2.bf16.msra.mxu0 0
    %275 = vmatprep.subr.bf16.mxu0 0
    %276 = vmatpush2.bf16.msra.mxu0 0
    %277 = vmatprep.subr.bf16.mxu0 0
    %278 = vmatpush2.bf16.msra.mxu0 0
    %279 = vmatprep.mubr.bf16.mxu0 0
    %280 = vmatmul.mubr.bf16.gmra.mxu0 %v47
    %v281 = vpop.f32.mrf.mxu0
    %v282 = vadd.f32 0.0, %v281
    %v283 = vpop.f32.mrf.mxu0
    %v284 = vadd.f32 0.0, %v283
    %v285 = vpop.f32.mrf.mxu0
    %v286 = vpop.f32.mrf.mxu0
    %287 = vdwg.mxu0
    %288 = vmatprep.subr.bf16.mxu0 %v214
    %289 = vmatpush1.bf16.msra.mxu0 %v213
    %290 = vmatprep.subr.bf16.mxu0 %v210
    %291 = vmatpush1.bf16.msra.mxu0 %v209
    %292 = vmatprep.subr.bf16.mxu0 %v206
    %293 = vmatpush1.bf16.msra.mxu0 %v205
    %294 = vmatprep.subr.bf16.mxu0 %v202
    %295 = vmatpush1.bf16.msra.mxu0 %v201
    %296 = vmatprep.subr.bf16.mxu0 %v198
    %297 = vmatpush1.bf16.msra.mxu0 %v197
    %298 = vmatprep.subr.bf16.mxu0 %v194
    %299 = vmatpush1.bf16.msra.mxu0 %v193
    %300 = vmatprep.subr.bf16.mxu0 %v190
    %301 = vmatpush1.bf16.msra.mxu0 %v189
    %302 = vmatprep.subr.bf16.mxu0 %v186
    %303 = vmatpush1.bf16.msra.mxu0 %v185
    %304 = vmatprep.subr.bf16.mxu0 0
    %305 = vmatpush2.bf16.msra.mxu0 0
    %306 = vmatprep.subr.bf16.mxu0 0
    %307 = vmatpush2.bf16.msra.mxu0 0
    %308 = vmatprep.subr.bf16.mxu0 0
    %309 = vmatpush2.bf16.msra.mxu0 0
    %310 = vmatprep.subr.bf16.mxu0 0
    %311 = vmatpush2.bf16.msra.mxu0 0
    %312 = vmatprep.subr.bf16.mxu0 0
    %313 = vmatpush2.bf16.msra.mxu0 0
    %314 = vmatprep.subr.bf16.mxu0 0
    %315 = vmatpush2.bf16.msra.mxu0 0
    %316 = vmatprep.subr.bf16.mxu0 0
    %317 = vmatpush2.bf16.msra.mxu0 0
    %318 = vmatprep.subr.bf16.mxu0 0
    %319 = vmatpush2.bf16.msra.mxu0 0
    %320 = vmatprep.mubr.bf16.mxu0 0
    %321 = vmatmul.mubr.bf16.gmra.mxu0 %v47
    %v322 = vpop.f32.mrf.mxu0
    %v323 = vadd.f32 0.0, %v322
    %v324 = vpop.f32.mrf.mxu0
    %v325 = vadd.f32 0.0, %v324
    %v326 = vpop.f32.mrf.mxu0
    %v327 = vpop.f32.mrf.mxu0
    %328 = vdwg.mxu0
    %v329 = vadd.f32 %v51, %v282
    %v330 = vadd.f32 %v52, %v284
    %v331 = vadd.f32 %v53, %v323
    %v332 = vadd.f32 %v54, %v325
    %v333 = vxor.u32 %v329, 2147483648
    %v334 = vmul.f32 %v333, 1.442695
    %v335 = vpow.pop %v334
    %v336 = vadd.f32 %v335, 1.0
    %v337 = vrcp.pop %v336
    %v338 = vmul.f32 1.0, %v337
    %v339 = vxor.u32 %v330, 2147483648
    %v340 = vmul.f32 %v339, 1.442695
    %v341 = vpow.pop %v340
    %v342 = vadd.f32 %v341, 1.0
    %v343 = vrcp.pop %v342
    %v344 = vmul.f32 1.0, %v343
    %v345 = vtanh.pop %v331
    %v346 = vxor.u32 %v332, 2147483648
    %v347 = vmul.f32 %v346, 1.442695
    %v348 = vpow.pop %v347
    %v349 = vadd.f32 %v348, 1.0
    %v350 = vrcp.pop %v349
    %v351 = vmul.f32 1.0, %v350
    %v352 = vmul.f32 %v344, %v48
    %v353 = vmul.f32 %v338, %v345
    %v354 = vadd.f32 %v352, %v353
    %v355 = vtanh.pop %v354
    %v356 = vmul.f32 %v351, %v355
    %357 = vst [vmem:[#allocation3] sm:$0xff] %v354
    %v358 = vpack.c.bf16 %v356, %v356
    %359 = vst [vmem:[#allocation2] sm:$0xf] %v358
    %360 = vst [vmem:[#allocation9] sm:$0xf] %v358
    %v361 = vld [vmem:[#allocation2] sm:$0xf]
    %v362 = vld [vmem:[#allocation3] sm:$0xff]
    %s363 = scalar_lea.vmem [#allocation4], 16
    %v364 = vld [vmem:[%s363] sm:$0xff]
    %v365 = vld [vmem:[%s363 + $0x8] sm:$0xff]
    %v366 = vunpack.c.l.bf16 %v364
    %v367 = vunpack.c.h.bf16 %v364
    %v368 = vunpack.c.l.bf16 %v365
    %v369 = vunpack.c.h.bf16 %v365
    %v370 = vld [vmem:[#allocation7] sm:$0xff]
    %v371 = vld [vmem:[#allocation7 + $0x8] sm:$0xff]
    %v372 = vld [vmem:[#allocation7 + $0x10] sm:$0xff]
    %v373 = vld [vmem:[#allocation7 + $0x18] sm:$0xff]
    %v374 = vld [vmem:[#allocation7 + $0x20] sm:$0xff]
    %v375 = vld [vmem:[#allocation7 + $0x28] sm:$0xff]
    %v376 = vld [vmem:[#allocation7 + $0x30] sm:$0xff]
    %v377 = vld [vmem:[#allocation7 + $0x38] sm:$0xff]
    %v378 = vld [vmem:[#allocation7 + $0x40] sm:$0xff]
    %v379 = vld [vmem:[#allocation7 + $0x48] sm:$0xff]
    %v380 = vld [vmem:[#allocation7 + $0x50] sm:$0xff]
    %v381 = vld [vmem:[#allocation7 + $0x58] sm:$0xff]
    %v382 = vld [vmem:[#allocation7 + $0x60] sm:$0xff]
    %v383 = vld [vmem:[#allocation7 + $0x68] sm:$0xff]
    %v384 = vld [vmem:[#allocation7 + $0x70] sm:$0xff]
    %v385 = vld [vmem:[#allocation7 + $0x78] sm:$0xff]
    %v386 = vld [vmem:[#allocation7 + $0x80] sm:$0xff]
    %v387 = vld [vmem:[#allocation7 + $0x88] sm:$0xff]
    %v388 = vld [vmem:[#allocation7 + $0x90] sm:$0xff]
    %v389 = vld [vmem:[#allocation7 + $0x98] sm:$0xff]
    %v390 = vld [vmem:[#allocation7 + $0xa0] sm:$0xff]
    %v391 = vld [vmem:[#allocation7 + $0xa8] sm:$0xff]
    %v392 = vld [vmem:[#allocation7 + $0xb0] sm:$0xff]
    %v393 = vld [vmem:[#allocation7 + $0xb8] sm:$0xff]
    %v394 = vld [vmem:[#allocation7 + $0xc0] sm:$0xff]
    %v395 = vld [vmem:[#allocation7 + $0xc8] sm:$0xff]
    %v396 = vld [vmem:[#allocation7 + $0xd0] sm:$0xff]
    %v397 = vld [vmem:[#allocation7 + $0xd8] sm:$0xff]
    %v398 = vld [vmem:[#allocation7 + $0xe0] sm:$0xff]
    %v399 = vld [vmem:[#allocation7 + $0xe8] sm:$0xff]
    %v400 = vld [vmem:[#allocation7 + $0xf0] sm:$0xff]
    %v401 = vld [vmem:[#allocation7 + $0xf8] sm:$0xff]
    %v434 = vunpack.c.l.b16 %v370
    %v435 = vunpack.c.h.b16 %v370
    %v436 = vunpack.c.l.b16 %v371
    %v437 = vunpack.c.h.b16 %v371
    %v438 = vunpack.c.l.b16 %v372
    %v439 = vunpack.c.h.b16 %v372
    %v440 = vunpack.c.l.b16 %v373
    %v441 = vunpack.c.h.b16 %v373
    %v442 = vunpack.c.l.b16 %v374
    %v443 = vunpack.c.h.b16 %v374
    %v444 = vunpack.c.l.b16 %v375
    %v445 = vunpack.c.h.b16 %v375
    %v446 = vunpack.c.l.b16 %v376
    %v447 = vunpack.c.h.b16 %v376
    %v448 = vunpack.c.l.b16 %v377
    %v449 = vunpack.c.h.b16 %v377
    %v450 = vunpack.c.l.b16 %v378
    %v451 = vunpack.c.h.b16 %v378
    %v452 = vunpack.c.l.b16 %v379
    %v453 = vunpack.c.h.b16 %v379
    %v454 = vunpack.c.l.b16 %v380
    %v455 = vunpack.c.h.b16 %v380
    %v456 = vunpack.c.l.b16 %v381
    %v457 = vunpack.c.h.b16 %v381
    %v458 = vunpack.c.l.b16 %v382
    %v459 = vunpack.c.h.b16 %v382
    %v460 = vunpack.c.l.b16 %v383
    %v461 = vunpack.c.h.b16 %v383
    %v462 = vunpack.c.l.b16 %v384
    %v463 = vunpack.c.h.b16 %v384
    %v464 = vunpack.c.l.b16 %v385
    %v465 = vunpack.c.h.b16 %v385
    %v466 = vunpack.c.l.b16 %v386
    %v467 = vunpack.c.h.b16 %v386
    %v468 = vunpack.c.l.b16 %v387
    %v469 = vunpack.c.h.b16 %v387
    %v470 = vunpack.c.l.b16 %v388
    %v471 = vunpack.c.h.b16 %v388
    %v472 = vunpack.c.l.b16 %v389
    %v473 = vunpack.c.h.b16 %v389
    %v474 = vunpack.c.l.b16 %v390
    %v475 = vunpack.c.h.b16 %v390
    %v476 = vunpack.c.l.b16 %v391
    %v477 = vunpack.c.h.b16 %v391
    %v478 = vunpack.c.l.b16 %v392
    %v479 = vunpack.c.h.b16 %v392
    %v480 = vunpack.c.l.b16 %v393
    %v481 = vunpack.c.h.b16 %v393
    %v482 = vunpack.c.l.b16 %v394
    %v483 = vunpack.c.h.b16 %v394
    %v484 = vunpack.c.l.b16 %v395
    %v485 = vunpack.c.h.b16 %v395
    %v486 = vunpack.c.l.b16 %v396
    %v487 = vunpack.c.h.b16 %v396
    %v488 = vunpack.c.l.b16 %v397
    %v489 = vunpack.c.h.b16 %v397
    %v490 = vunpack.c.l.b16 %v398
    %v491 = vunpack.c.h.b16 %v398
    %v492 = vunpack.c.l.b16 %v399
    %v493 = vunpack.c.h.b16 %v399
    %v494 = vunpack.c.l.b16 %v400
    %v495 = vunpack.c.h.b16 %v400
    %v496 = vunpack.c.l.b16 %v401
    %v497 = vunpack.c.h.b16 %v401
    %v498 = vpack.c.b16 %v438, %v434
    %v499 = vpack.c.b16 %v439, %v435
    %v500 = vpack.c.b16 %v440, %v436
    %v501 = vpack.c.b16 %v441, %v437
    %v502 = vpack.c.b16 %v446, %v442
    %v503 = vpack.c.b16 %v447, %v443
    %v504 = vpack.c.b16 %v448, %v444
    %v505 = vpack.c.b16 %v449, %v445
    %v506 = vpack.c.b16 %v454, %v450
    %v507 = vpack.c.b16 %v455, %v451
    %v508 = vpack.c.b16 %v456, %v452
    %v509 = vpack.c.b16 %v457, %v453
    %v510 = vpack.c.b16 %v462, %v458
    %v511 = vpack.c.b16 %v463, %v459
    %v512 = vpack.c.b16 %v464, %v460
    %v513 = vpack.c.b16 %v465, %v461
    %v514 = vpack.c.b16 %v470, %v466
    %v515 = vpack.c.b16 %v471, %v467
    %v516 = vpack.c.b16 %v472, %v468
    %v517 = vpack.c.b16 %v473, %v469
    %v518 = vpack.c.b16 %v478, %v474
    %v519 = vpack.c.b16 %v479, %v475
    %v520 = vpack.c.b16 %v480, %v476
    %v521 = vpack.c.b16 %v481, %v477
    %v522 = vpack.c.b16 %v486, %v482
    %v523 = vpack.c.b16 %v487, %v483
    %v524 = vpack.c.b16 %v488, %v484
    %v525 = vpack.c.b16 %v489, %v485
    %v526 = vpack.c.b16 %v494, %v490
    %v527 = vpack.c.b16 %v495, %v491
    %v528 = vpack.c.b16 %v496, %v492
    %v529 = vpack.c.b16 %v497, %v493
    %562 = vmatprep.subr.bf16.mxu0 %v527
    %563 = vmatpush1.bf16.msra.mxu0 %v526
    %564 = vmatprep.subr.bf16.mxu0 %v523
    %565 = vmatpush1.bf16.msra.mxu0 %v522
    %566 = vmatprep.subr.bf16.mxu0 %v519
    %567 = vmatpush1.bf16.msra.mxu0 %v518
    %568 = vmatprep.subr.bf16.mxu0 %v515
    %569 = vmatpush1.bf16.msra.mxu0 %v514
    %570 = vmatprep.subr.bf16.mxu0 %v511
    %571 = vmatpush1.bf16.msra.mxu0 %v510
    %572 = vmatprep.subr.bf16.mxu0 %v507
    %573 = vmatpush1.bf16.msra.mxu0 %v506
    %574 = vmatprep.subr.bf16.mxu0 %v503
    %575 = vmatpush1.bf16.msra.mxu0 %v502
    %576 = vmatprep.subr.bf16.mxu0 %v499
    %577 = vmatpush1.bf16.msra.mxu0 %v498
    %578 = vmatprep.subr.bf16.mxu0 0
    %579 = vmatpush2.bf16.msra.mxu0 0
    %580 = vmatprep.subr.bf16.mxu0 0
    %581 = vmatpush2.bf16.msra.mxu0 0
    %582 = vmatprep.subr.bf16.mxu0 0
    %583 = vmatpush2.bf16.msra.mxu0 0
    %584 = vmatprep.subr.bf16.mxu0 0
    %585 = vmatpush2.bf16.msra.mxu0 0
    %586 = vmatprep.subr.bf16.mxu0 0
    %587 = vmatpush2.bf16.msra.mxu0 0
    %588 = vmatprep.subr.bf16.mxu0 0
    %589 = vmatpush2.bf16.msra.mxu0 0
    %590 = vmatprep.subr.bf16.mxu0 0
    %591 = vmatpush2.bf16.msra.mxu0 0
    %592 = vmatprep.subr.bf16.mxu0 0
    %593 = vmatpush2.bf16.msra.mxu0 0
    %594 = vmatprep.mubr.bf16.mxu0 0
    %595 = vmatmul.mubr.bf16.gmra.mxu0 %v361
    %v596 = vpop.f32.mrf.mxu0
    %v597 = vadd.f32 0.0, %v596
    %v598 = vpop.f32.mrf.mxu0
    %v599 = vadd.f32 0.0, %v598
    %v600 = vpop.f32.mrf.mxu0
    %v601 = vpop.f32.mrf.mxu0
    %602 = vdwg.mxu0
    %603 = vmatprep.subr.bf16.mxu0 %v529
    %604 = vmatpush1.bf16.msra.mxu0 %v528
    %605 = vmatprep.subr.bf16.mxu0 %v525
    %606 = vmatpush1.bf16.msra.mxu0 %v524
    %607 = vmatprep.subr.bf16.mxu0 %v521
    %608 = vmatpush1.bf16.msra.mxu0 %v520
    %609 = vmatprep.subr.bf16.mxu0 %v517
    %610 = vmatpush1.bf16.msra.mxu0 %v516
    %611 = vmatprep.subr.bf16.mxu0 %v513
    %612 = vmatpush1.bf16.msra.mxu0 %v512
    %613 = vmatprep.subr.bf16.mxu0 %v509
    %614 = vmatpush1.bf16.msra.mxu0 %v508
    %615 = vmatprep.subr.bf16.mxu0 %v505
    %616 = vmatpush1.bf16.msra.mxu0 %v504
    %617 = vmatprep.subr.bf16.mxu0 %v501
    %618 = vmatpush1.bf16.msra.mxu0 %v500
    %619 = vmatprep.subr.bf16.mxu0 0
    %620 = vmatpush2.bf16.msra.mxu0 0
    %621 = vmatprep.subr.bf16.mxu0 0
    %622 = vmatpush2.bf16.msra.mxu0 0
    %623 = vmatprep.subr.bf16.mxu0 0
    %624 = vmatpush2.bf16.msra.mxu0 0
    %625 = vmatprep.subr.bf16.mxu0 0
    %626 = vmatpush2.bf16.msra.mxu0 0
    %627 = vmatprep.subr.bf16.mxu0 0
    %628 = vmatpush2.bf16.msra.mxu0 0
    %629 = vmatprep.subr.bf16.mxu0 0
    %630 = vmatpush2.bf16.msra.mxu0 0
    %631 = vmatprep.subr.bf16.mxu0 0
    %632 = vmatpush2.bf16.msra.mxu0 0
    %633 = vmatprep.subr.bf16.mxu0 0
    %634 = vmatpush2.bf16.msra.mxu0 0
    %635 = vmatprep.mubr.bf16.mxu0 0
    %636 = vmatmul.mubr.bf16.gmra.mxu0 %v361
    %v637 = vpop.f32.mrf.mxu0
    %v638 = vadd.f32 0.0, %v637
    %v639 = vpop.f32.mrf.mxu0
    %v640 = vadd.f32 0.0, %v639
    %v641 = vpop.f32.mrf.mxu0
    %v642 = vpop.f32.mrf.mxu0
    %643 = vdwg.mxu0
    %v644 = vadd.f32 %v366, %v597
    %v645 = vadd.f32 %v367, %v599
    %v646 = vadd.f32 %v368, %v638
    %v647 = vadd.f32 %v369, %v640
    %v648 = vxor.u32 %v644, 2147483648
    %v649 = vmul.f32 %v648, 1.442695
    %v650 = vpow.pop %v649
    %v651 = vadd.f32 %v650, 1.0
    %v652 = vrcp.pop %v651
    %v653 = vmul.f32 1.0, %v652
    %v654 = vxor.u32 %v645, 2147483648
    %v655 = vmul.f32 %v654, 1.442695
    %v656 = vpow.pop %v655
    %v657 = vadd.f32 %v656, 1.0
    %v658 = vrcp.pop %v657
    %v659 = vmul.f32 1.0, %v658
    %v660 = vtanh.pop %v646
    %v661 = vxor.u32 %v647, 2147483648
    %v662 = vmul.f32 %v661, 1.442695
    %v663 = vpow.pop %v662
    %v664 = vadd.f32 %v663, 1.0
    %v665 = vrcp.pop %v664
    %v666 = vmul.f32 1.0, %v665
    %v667 = vmul.f32 %v659, %v362
    %v668 = vmul.f32 %v653, %v660
    %v669 = vadd.f32 %v667, %v668
    %v670 = vtanh.pop %v669
    %v671 = vmul.f32 %v666, %v670
    %672 = vst [vmem:[#allocation3] sm:$0xff] %v669
    %v673 = vpack.c.bf16 %v671, %v671
    %674 = vst [vmem:[#allocation2] sm:$0xf] %v673
    %s675 = scalar_lea.vmem [#allocation9], 4
    %676 = vst [vmem:[%s675] sm:$0xf] %v673
    %v677 = vld [vmem:[#allocation2] sm:$0xf]
    %v678 = vld [vmem:[#allocation3] sm:$0xff]
    %s679 = scalar_lea.vmem [#allocation4], 32
    %v680 = vld [vmem:[%s679] sm:$0xff]
    %v681 = vld [vmem:[%s679 + $0x8] sm:$0xff]
    %v682 = vunpack.c.l.bf16 %v680
    %v683 = vunpack.c.h.bf16 %v680
    %v684 = vunpack.c.l.bf16 %v681
    %v685 = vunpack.c.h.bf16 %v681
    %v686 = vld [vmem:[#allocation7] sm:$0xff]
    %v687 = vld [vmem:[#allocation7 + $0x8] sm:$0xff]
    %v688 = vld [vmem:[#allocation7 + $0x10] sm:$0xff]
    %v689 = vld [vmem:[#allocation7 + $0x18] sm:$0xff]
    %v690 = vld [vmem:[#allocation7 + $0x20] sm:$0xff]
    %v691 = vld [vmem:[#allocation7 + $0x28] sm:$0xff]
    %v692 = vld [vmem:[#allocation7 + $0x30] sm:$0xff]
    %v693 = vld [vmem:[#allocation7 + $0x38] sm:$0xff]
    %v694 = vld [vmem:[#allocation7 + $0x40] sm:$0xff]
    %v695 = vld [vmem:[#allocation7 + $0x48] sm:$0xff]
    %v696 = vld [vmem:[#allocation7 + $0x50] sm:$0xff]
    %v697 = vld [vmem:[#allocation7 + $0x58] sm:$0xff]
    %v698 = vld [vmem:[#allocation7 + $0x60] sm:$0xff]
    %v699 = vld [vmem:[#allocation7 + $0x68] sm:$0xff]
    %v700 = vld [vmem:[#allocation7 + $0x70] sm:$0xff]
    %v701 = vld [vmem:[#allocation7 + $0x78] sm:$0xff]
    %v702 = vld [vmem:[#allocation7 + $0x80] sm:$0xff]
    %v703 = vld [vmem:[#allocation7 + $0x88] sm:$0xff]
    %v704 = vld [vmem:[#allocation7 + $0x90] sm:$0xff]
    %v705 = vld [vmem:[#allocation7 + $0x98] sm:$0xff]
    %v706 = vld [vmem:[#allocation7 + $0xa0] sm:$0xff]
    %v707 = vld [vmem:[#allocation7 + $0xa8] sm:$0xff]
    %v708 = vld [vmem:[#allocation7 + $0xb0] sm:$0xff]
    %v709 = vld [vmem:[#allocation7 + $0xb8] sm:$0xff]
    %v710 = vld [vmem:[#allocation7 + $0xc0] sm:$0xff]
    %v711 = vld [vmem:[#allocation7 + $0xc8] sm:$0xff]
    %v712 = vld [vmem:[#allocation7 + $0xd0] sm:$0xff]
    %v713 = vld [vmem:[#allocation7 + $0xd8] sm:$0xff]
    %v714 = vld [vmem:[#allocation7 + $0xe0] sm:$0xff]
    %v715 = vld [vmem:[#allocation7 + $0xe8] sm:$0xff]
    %v716 = vld [vmem:[#allocation7 + $0xf0] sm:$0xff]
    %v717 = vld [vmem:[#allocation7 + $0xf8] sm:$0xff]
    %v750 = vunpack.c.l.b16 %v686
    %v751 = vunpack.c.h.b16 %v686
    %v752 = vunpack.c.l.b16 %v687
    %v753 = vunpack.c.h.b16 %v687
    %v754 = vunpack.c.l.b16 %v688
    %v755 = vunpack.c.h.b16 %v688
    %v756 = vunpack.c.l.b16 %v689
    %v757 = vunpack.c.h.b16 %v689
    %v758 = vunpack.c.l.b16 %v690
    %v759 = vunpack.c.h.b16 %v690
    %v760 = vunpack.c.l.b16 %v691
    %v761 = vunpack.c.h.b16 %v691
    %v762 = vunpack.c.l.b16 %v692
    %v763 = vunpack.c.h.b16 %v692
    %v764 = vunpack.c.l.b16 %v693
    %v765 = vunpack.c.h.b16 %v693
    %v766 = vunpack.c.l.b16 %v694
    %v767 = vunpack.c.h.b16 %v694
    %v768 = vunpack.c.l.b16 %v695
    %v769 = vunpack.c.h.b16 %v695
    %v770 = vunpack.c.l.b16 %v696
    %v771 = vunpack.c.h.b16 %v696
    %v772 = vunpack.c.l.b16 %v697
    %v773 = vunpack.c.h.b16 %v697
    %v774 = vunpack.c.l.b16 %v698
    %v775 = vunpack.c.h.b16 %v698
    %v776 = vunpack.c.l.b16 %v699
    %v777 = vunpack.c.h.b16 %v699
    %v778 = vunpack.c.l.b16 %v700
    %v779 = vunpack.c.h.b16 %v700
    %v780 = vunpack.c.l.b16 %v701
    %v781 = vunpack.c.h.b16 %v701
    %v782 = vunpack.c.l.b16 %v702
    %v783 = vunpack.c.h.b16 %v702
    %v784 = vunpack.c.l.b16 %v703
    %v785 = vunpack.c.h.b16 %v703
    %v786 = vunpack.c.l.b16 %v704
    %v787 = vunpack.c.h.b16 %v704
    %v788 = vunpack.c.l.b16 %v705
    %v789 = vunpack.c.h.b16 %v705
    %v790 = vunpack.c.l.b16 %v706
    %v791 = vunpack.c.h.b16 %v706
    %v792 = vunpack.c.l.b16 %v707
    %v793 = vunpack.c.h.b16 %v707
    %v794 = vunpack.c.l.b16 %v708
    %v795 = vunpack.c.h.b16 %v708
    %v796 = vunpack.c.l.b16 %v709
    %v797 = vunpack.c.h.b16 %v709
    %v798 = vunpack.c.l.b16 %v710
    %v799 = vunpack.c.h.b16 %v710
    %v800 = vunpack.c.l.b16 %v711
    %v801 = vunpack.c.h.b16 %v711
    %v802 = vunpack.c.l.b16 %v712
    %v803 = vunpack.c.h.b16 %v712
    %v804 = vunpack.c.l.b16 %v713
    %v805 = vunpack.c.h.b16 %v713
    %v806 = vunpack.c.l.b16 %v714
    %v807 = vunpack.c.h.b16 %v714
    %v808 = vunpack.c.l.b16 %v715
    %v809 = vunpack.c.h.b16 %v715
    %v810 = vunpack.c.l.b16 %v716
    %v811 = vunpack.c.h.b16 %v716
    %v812 = vunpack.c.l.b16 %v717
    %v813 = vunpack.c.h.b16 %v717
    %v814 = vpack.c.b16 %v754, %v750
    %v815 = vpack.c.b16 %v755, %v751
    %v816 = vpack.c.b16 %v756, %v752
    %v817 = vpack.c.b16 %v757, %v753
    %v818 = vpack.c.b16 %v762, %v758
    %v819 = vpack.c.b16 %v763, %v759
    %v820 = vpack.c.b16 %v764, %v760
    %v821 = vpack.c.b16 %v765, %v761
    %v822 = vpack.c.b16 %v770, %v766
    %v823 = vpack.c.b16 %v771, %v767
    %v824 = vpack.c.b16 %v772, %v768
    %v825 = vpack.c.b16 %v773, %v769
    %v826 = vpack.c.b16 %v778, %v774
    %v827 = vpack.c.b16 %v779, %v775
    %v828 = vpack.c.b16 %v780, %v776
    %v829 = vpack.c.b16 %v781, %v777
    %v830 = vpack.c.b16 %v786, %v782
    %v831 = vpack.c.b16 %v787, %v783
    %v832 = vpack.c.b16 %v788, %v784
    %v833 = vpack.c.b16 %v789, %v785
    %v834 = vpack.c.b16 %v794, %v790
    %v835 = vpack.c.b16 %v795, %v791
    %v836 = vpack.c.b16 %v796, %v792
    %v837 = vpack.c.b16 %v797, %v793
    %v838 = vpack.c.b16 %v802, %v798
    %v839 = vpack.c.b16 %v803, %v799
    %v840 = vpack.c.b16 %v804, %v800
    %v841 = vpack.c.b16 %v805, %v801
    %v842 = vpack.c.b16 %v810, %v806
    %v843 = vpack.c.b16 %v811, %v807
    %v844 = vpack.c.b16 %v812, %v808
    %v845 = vpack.c.b16 %v813, %v809
    %878 = vmatprep.subr.bf16.mxu0 %v843
    %879 = vmatpush1.bf16.msra.mxu0 %v842
    %880 = vmatprep.subr.bf16.mxu0 %v839
    %881 = vmatpush1.bf16.msra.mxu0 %v838
    %882 = vmatprep.subr.bf16.mxu0 %v835
    %883 = vmatpush1.bf16.msra.mxu0 %v834
    %884 = vmatprep.subr.bf16.mxu0 %v831
    %885 = vmatpush1.bf16.msra.mxu0 %v830
    %886 = vmatprep.subr.bf16.mxu0 %v827
    %887 = vmatpush1.bf16.msra.mxu0 %v826
    %888 = vmatprep.subr.bf16.mxu0 %v823
    %889 = vmatpush1.bf16.msra.mxu0 %v822
    %890 = vmatprep.subr.bf16.mxu0 %v819
    %891 = vmatpush1.bf16.msra.mxu0 %v818
    %892 = vmatprep.subr.bf16.mxu0 %v815
    %893 = vmatpush1.bf16.msra.mxu0 %v814
    %894 = vmatprep.subr.bf16.mxu0 0
    %895 = vmatpush2.bf16.msra.mxu0 0
    %896 = vmatprep.subr.bf16.mxu0 0
    %897 = vmatpush2.bf16.msra.mxu0 0
    %898 = vmatprep.subr.bf16.mxu0 0
    %899 = vmatpush2.bf16.msra.mxu0 0
    %900 = vmatprep.subr.bf16.mxu0 0
    %901 = vmatpush2.bf16.msra.mxu0 0
    %902 = vmatprep.subr.bf16.mxu0 0
    %903 = vmatpush2.bf16.msra.mxu0 0
    %904 = vmatprep.subr.bf16.mxu0 0
    %905 = vmatpush2.bf16.msra.mxu0 0
    %906 = vmatprep.subr.bf16.mxu0 0
    %907 = vmatpush2.bf16.msra.mxu0 0
    %908 = vmatprep.subr.bf16.mxu0 0
    %909 = vmatpush2.bf16.msra.mxu0 0
    %910 = vmatprep.mubr.bf16.mxu0 0
    %911 = vmatmul.mubr.bf16.gmra.mxu0 %v677
    %v912 = vpop.f32.mrf.mxu0
    %v913 = vadd.f32 0.0, %v912
    %v914 = vpop.f32.mrf.mxu0
    %v915 = vadd.f32 0.0, %v914
    %v916 = vpop.f32.mrf.mxu0
    %v917 = vpop.f32.mrf.mxu0
    %918 = vdwg.mxu0
    %919 = vmatprep.subr.bf16.mxu0 %v845
    %920 = vmatpush1.bf16.msra.mxu0 %v844
    %921 = vmatprep.subr.bf16.mxu0 %v841
    %922 = vmatpush1.bf16.msra.mxu0 %v840
    %923 = vmatprep.subr.bf16.mxu0 %v837
    %924 = vmatpush1.bf16.msra.mxu0 %v836
    %925 = vmatprep.subr.bf16.mxu0 %v833
    %926 = vmatpush1.bf16.msra.mxu0 %v832
    %927 = vmatprep.subr.bf16.mxu0 %v829
    %928 = vmatpush1.bf16.msra.mxu0 %v828
    %929 = vmatprep.subr.bf16.mxu0 %v825
    %930 = vmatpush1.bf16.msra.mxu0 %v824
    %931 = vmatprep.subr.bf16.mxu0 %v821
    %932 = vmatpush1.bf16.msra.mxu0 %v820
    %933 = vmatprep.subr.bf16.mxu0 %v817
    %934 = vmatpush1.bf16.msra.mxu0 %v816
    %935 = vmatprep.subr.bf16.mxu0 0
    %936 = vmatpush2.bf16.msra.mxu0 0
    %937 = vmatprep.subr.bf16.mxu0 0
    %938 = vmatpush2.bf16.msra.mxu0 0
    %939 = vmatprep.subr.bf16.mxu0 0
    %940 = vmatpush2.bf16.msra.mxu0 0
    %941 = vmatprep.subr.bf16.mxu0 0
    %942 = vmatpush2.bf16.msra.mxu0 0
    %943 = vmatprep.subr.bf16.mxu0 0
    %944 = vmatpush2.bf16.msra.mxu0 0
    %945 = vmatprep.subr.bf16.mxu0 0
    %946 = vmatpush2.bf16.msra.mxu0 0
    %947 = vmatprep.subr.bf16.mxu0 0
    %948 = vmatpush2.bf16.msra.mxu0 0
    %949 = vmatprep.subr.bf16.mxu0 0
    %950 = vmatpush2.bf16.msra.mxu0 0
    %951 = vmatprep.mubr.bf16.mxu0 0
    %952 = vmatmul.mubr.bf16.gmra.mxu0 %v677
    %v953 = vpop.f32.mrf.mxu0
    %v954 = vadd.f32 0.0, %v953
    %v955 = vpop.f32.mrf.mxu0
    %v956 = vadd.f32 0.0, %v955
    %v957 = vpop.f32.mrf.mxu0
    %v958 = vpop.f32.mrf.mxu0
    %959 = vdwg.mxu0
    %v960 = vadd.f32 %v682, %v913
    %v961 = vadd.f32 %v683, %v915
    %v962 = vadd.f32 %v684, %v954
    %v963 = vadd.f32 %v685, %v956
    %v964 = vxor.u32 %v960, 2147483648
    %v965 = vmul.f32 %v964, 1.442695
    %v966 = vpow.pop %v965
    %v967 = vadd.f32 %v966, 1.0
    %v968 = vrcp.pop %v967
    %v969 = vmul.f32 1.0, %v968
    %v970 = vxor.u32 %v961, 2147483648
    %v971 = vmul.f32 %v970, 1.442695
    %v972 = vpow.pop %v971
    %v973 = vadd.f32 %v972, 1.0
    %v974 = vrcp.pop %v973
    %v975 = vmul.f32 1.0, %v974
    %v976 = vtanh.pop %v962
    %v977 = vxor.u32 %v963, 2147483648
    %v978 = vmul.f32 %v977, 1.442695
    %v979 = vpow.pop %v978
    %v980 = vadd.f32 %v979, 1.0
    %v981 = vrcp.pop %v980
    %v982 = vmul.f32 1.0, %v981
    %v983 = vmul.f32 %v975, %v678
    %v984 = vmul.f32 %v969, %v976
    %v985 = vadd.f32 %v983, %v984
    %v986 = vtanh.pop %v985
    %v987 = vmul.f32 %v982, %v986
    %988 = vst [vmem:[#allocation3] sm:$0xff] %v985
    %v989 = vpack.c.bf16 %v987, %v987
    %990 = vst [vmem:[#allocation2] sm:$0xf] %v989
    %s991 = scalar_lea.vmem [#allocation9], 8
    %992 = vst [vmem:[%s991] sm:$0xf] %v989
    %v993 = vld [vmem:[#allocation2] sm:$0xf]
    %v994 = vld [vmem:[#allocation3] sm:$0xff]
    %s995 = scalar_lea.vmem [#allocation4], 48
    %v996 = vld [vmem:[%s995] sm:$0xff]
    %v997 = vld [vmem:[%s995 + $0x8] sm:$0xff]
    %v998 = vunpack.c.l.bf16 %v996
    %v999 = vunpack.c.h.bf16 %v996
    %v1000 = vunpack.c.l.bf16 %v997
    %v1001 = vunpack.c.h.bf16 %v997
    %v1002 = vld [vmem:[#allocation7] sm:$0xff]
    %v1003 = vld [vmem:[#allocation7 + $0x8] sm:$0xff]
    %v1004 = vld [vmem:[#allocation7 + $0x10] sm:$0xff]
    %v1005 = vld [vmem:[#allocation7 + $0x18] sm:$0xff]
    %v1006 = vld [vmem:[#allocation7 + $0x20] sm:$0xff]
    %v1007 = vld [vmem:[#allocation7 + $0x28] sm:$0xff]
    %v1008 = vld [vmem:[#allocation7 + $0x30] sm:$0xff]
    %v1009 = vld [vmem:[#allocation7 + $0x38] sm:$0xff]
    %v1010 = vld [vmem:[#allocation7 + $0x40] sm:$0xff]
    %v1011 = vld [vmem:[#allocation7 + $0x48] sm:$0xff]
    %v1012 = vld [vmem:[#allocation7 + $0x50] sm:$0xff]
    %v1013 = vld [vmem:[#allocation7 + $0x58] sm:$0xff]
    %v1014 = vld [vmem:[#allocation7 + $0x60] sm:$0xff]
    %v1015 = vld [vmem:[#allocation7 + $0x68] sm:$0xff]
    %v1016 = vld [vmem:[#allocation7 + $0x70] sm:$0xff]
    %v1017 = vld [vmem:[#allocation7 + $0x78] sm:$0xff]
    %v1018 = vld [vmem:[#allocation7 + $0x80] sm:$0xff]
    %v1019 = vld [vmem:[#allocation7 + $0x88] sm:$0xff]
    %v1020 = vld [vmem:[#allocation7 + $0x90] sm:$0xff]
    %v1021 = vld [vmem:[#allocation7 + $0x98] sm:$0xff]
    %v1022 = vld [vmem:[#allocation7 + $0xa0] sm:$0xff]
    %v1023 = vld [vmem:[#allocation7 + $0xa8] sm:$0xff]
    %v1024 = vld [vmem:[#allocation7 + $0xb0] sm:$0xff]
    %v1025 = vld [vmem:[#allocation7 + $0xb8] sm:$0xff]
    %v1026 = vld [vmem:[#allocation7 + $0xc0] sm:$0xff]
    %v1027 = vld [vmem:[#allocation7 + $0xc8] sm:$0xff]
    %v1028 = vld [vmem:[#allocation7 + $0xd0] sm:$0xff]
    %v1029 = vld [vmem:[#allocation7 + $0xd8] sm:$0xff]
    %v1030 = vld [vmem:[#allocation7 + $0xe0] sm:$0xff]
    %v1031 = vld [vmem:[#allocation7 + $0xe8] sm:$0xff]
    %v1032 = vld [vmem:[#allocation7 + $0xf0] sm:$0xff]
    %v1033 = vld [vmem:[#allocation7 + $0xf8] sm:$0xff]
    %v1066 = vunpack.c.l.b16 %v1002
    %v1067 = vunpack.c.h.b16 %v1002
    %v1068 = vunpack.c.l.b16 %v1003
    %v1069 = vunpack.c.h.b16 %v1003
    %v1070 = vunpack.c.l.b16 %v1004
    %v1071 = vunpack.c.h.b16 %v1004
    %v1072 = vunpack.c.l.b16 %v1005
    %v1073 = vunpack.c.h.b16 %v1005
    %v1074 = vunpack.c.l.b16 %v1006
    %v1075 = vunpack.c.h.b16 %v1006
    %v1076 = vunpack.c.l.b16 %v1007
    %v1077 = vunpack.c.h.b16 %v1007
    %v1078 = vunpack.c.l.b16 %v1008
    %v1079 = vunpack.c.h.b16 %v1008
    %v1080 = vunpack.c.l.b16 %v1009
    %v1081 = vunpack.c.h.b16 %v1009
    %v1082 = vunpack.c.l.b16 %v1010
    %v1083 = vunpack.c.h.b16 %v1010
    %v1084 = vunpack.c.l.b16 %v1011
    %v1085 = vunpack.c.h.b16 %v1011
    %v1086 = vunpack.c.l.b16 %v1012
    %v1087 = vunpack.c.h.b16 %v1012
    %v1088 = vunpack.c.l.b16 %v1013
    %v1089 = vunpack.c.h.b16 %v1013
    %v1090 = vunpack.c.l.b16 %v1014
    %v1091 = vunpack.c.h.b16 %v1014
    %v1092 = vunpack.c.l.b16 %v1015
    %v1093 = vunpack.c.h.b16 %v1015
    %v1094 = vunpack.c.l.b16 %v1016
    %v1095 = vunpack.c.h.b16 %v1016
    %v1096 = vunpack.c.l.b16 %v1017
    %v1097 = vunpack.c.h.b16 %v1017
    %v1098 = vunpack.c.l.b16 %v1018
    %v1099 = vunpack.c.h.b16 %v1018
    %v1100 = vunpack.c.l.b16 %v1019
    %v1101 = vunpack.c.h.b16 %v1019
    %v1102 = vunpack.c.l.b16 %v1020
    %v1103 = vunpack.c.h.b16 %v1020
    %v1104 = vunpack.c.l.b16 %v1021
    %v1105 = vunpack.c.h.b16 %v1021
    %v1106 = vunpack.c.l.b16 %v1022
    %v1107 = vunpack.c.h.b16 %v1022
    %v1108 = vunpack.c.l.b16 %v1023
    %v1109 = vunpack.c.h.b16 %v1023
    %v1110 = vunpack.c.l.b16 %v1024
    %v1111 = vunpack.c.h.b16 %v1024
    %v1112 = vunpack.c.l.b16 %v1025
    %v1113 = vunpack.c.h.b16 %v1025
    %v1114 = vunpack.c.l.b16 %v1026
    %v1115 = vunpack.c.h.b16 %v1026
    %v1116 = vunpack.c.l.b16 %v1027
    %v1117 = vunpack.c.h.b16 %v1027
    %v1118 = vunpack.c.l.b16 %v1028
    %v1119 = vunpack.c.h.b16 %v1028
    %v1120 = vunpack.c.l.b16 %v1029
    %v1121 = vunpack.c.h.b16 %v1029
    %v1122 = vunpack.c.l.b16 %v1030
    %v1123 = vunpack.c.h.b16 %v1030
    %v1124 = vunpack.c.l.b16 %v1031
    %v1125 = vunpack.c.h.b16 %v1031
    %v1126 = vunpack.c.l.b16 %v1032
    %v1127 = vunpack.c.h.b16 %v1032
    %v1128 = vunpack.c.l.b16 %v1033
    %v1129 = vunpack.c.h.b16 %v1033
    %v1130 = vpack.c.b16 %v1070, %v1066
    %v1131 = vpack.c.b16 %v1071, %v1067
    %v1132 = vpack.c.b16 %v1072, %v1068
    %v1133 = vpack.c.b16 %v1073, %v1069
    %v1134 = vpack.c.b16 %v1078, %v1074
    %v1135 = vpack.c.b16 %v1079, %v1075
    %v1136 = vpack.c.b16 %v1080, %v1076
    %v1137 = vpack.c.b16 %v1081, %v1077
    %v1138 = vpack.c.b16 %v1086, %v1082
    %v1139 = vpack.c.b16 %v1087, %v1083
    %v1140 = vpack.c.b16 %v1088, %v1084
    %v1141 = vpack.c.b16 %v1089, %v1085
    %v1142 = vpack.c.b16 %v1094, %v1090
    %v1143 = vpack.c.b16 %v1095, %v1091
    %v1144 = vpack.c.b16 %v1096, %v1092
    %v1145 = vpack.c.b16 %v1097, %v1093
    %v1146 = vpack.c.b16 %v1102, %v1098
    %v1147 = vpack.c.b16 %v1103, %v1099
    %v1148 = vpack.c.b16 %v1104, %v1100
    %v1149 = vpack.c.b16 %v1105, %v1101
    %v1150 = vpack.c.b16 %v1110, %v1106
    %v1151 = vpack.c.b16 %v1111, %v1107
    %v1152 = vpack.c.b16 %v1112, %v1108
    %v1153 = vpack.c.b16 %v1113, %v1109
    %v1154 = vpack.c.b16 %v1118, %v1114
    %v1155 = vpack.c.b16 %v1119, %v1115
    %v1156 = vpack.c.b16 %v1120, %v1116
    %v1157 = vpack.c.b16 %v1121, %v1117
    %v1158 = vpack.c.b16 %v1126, %v1122
    %v1159 = vpack.c.b16 %v1127, %v1123
    %v1160 = vpack.c.b16 %v1128, %v1124
    %v1161 = vpack.c.b16 %v1129, %v1125
    %1194 = vmatprep.subr.bf16.mxu0 %v1159
    %1195 = vmatpush1.bf16.msra.mxu0 %v1158
    %1196 = vmatprep.subr.bf16.mxu0 %v1155
    %1197 = vmatpush1.bf16.msra.mxu0 %v1154
    %1198 = vmatprep.subr.bf16.mxu0 %v1151
    %1199 = vmatpush1.bf16.msra.mxu0 %v1150
    %1200 = vmatprep.subr.bf16.mxu0 %v1147
    %1201 = vmatpush1.bf16.msra.mxu0 %v1146
    %1202 = vmatprep.subr.bf16.mxu0 %v1143
    %1203 = vmatpush1.bf16.msra.mxu0 %v1142
    %1204 = vmatprep.subr.bf16.mxu0 %v1139
    %1205 = vmatpush1.bf16.msra.mxu0 %v1138
    %1206 = vmatprep.subr.bf16.mxu0 %v1135
    %1207 = vmatpush1.bf16.msra.mxu0 %v1134
    %1208 = vmatprep.subr.bf16.mxu0 %v1131
    %1209 = vmatpush1.bf16.msra.mxu0 %v1130
    %1210 = vmatprep.subr.bf16.mxu0 0
    %1211 = vmatpush2.bf16.msra.mxu0 0
    %1212 = vmatprep.subr.bf16.mxu0 0
    %1213 = vmatpush2.bf16.msra.mxu0 0
    %1214 = vmatprep.subr.bf16.mxu0 0
    %1215 = vmatpush2.bf16.msra.mxu0 0
    %1216 = vmatprep.subr.bf16.mxu0 0
    %1217 = vmatpush2.bf16.msra.mxu0 0
    %1218 = vmatprep.subr.bf16.mxu0 0
    %1219 = vmatpush2.bf16.msra.mxu0 0
    %1220 = vmatprep.subr.bf16.mxu0 0
    %1221 = vmatpush2.bf16.msra.mxu0 0
    %1222 = vmatprep.subr.bf16.mxu0 0
    %1223 = vmatpush2.bf16.msra.mxu0 0
    %1224 = vmatprep.subr.bf16.mxu0 0
    %1225 = vmatpush2.bf16.msra.mxu0 0
    %1226 = vmatprep.mubr.bf16.mxu0 0
    %1227 = vmatmul.mubr.bf16.gmra.mxu0 %v993
    %v1228 = vpop.f32.mrf.mxu0
    %v1229 = vadd.f32 0.0, %v1228
    %v1230 = vpop.f32.mrf.mxu0
    %v1231 = vadd.f32 0.0, %v1230
    %v1232 = vpop.f32.mrf.mxu0
    %v1233 = vpop.f32.mrf.mxu0
    %1234 = vdwg.mxu0
    %1235 = vmatprep.subr.bf16.mxu0 %v1161
    %1236 = vmatpush1.bf16.msra.mxu0 %v1160
    %1237 = vmatprep.subr.bf16.mxu0 %v1157
    %1238 = vmatpush1.bf16.msra.mxu0 %v1156
    %1239 = vmatprep.subr.bf16.mxu0 %v1153
    %1240 = vmatpush1.bf16.msra.mxu0 %v1152
    %1241 = vmatprep.subr.bf16.mxu0 %v1149
    %1242 = vmatpush1.bf16.msra.mxu0 %v1148
    %1243 = vmatprep.subr.bf16.mxu0 %v1145
    %1244 = vmatpush1.bf16.msra.mxu0 %v1144
    %1245 = vmatprep.subr.bf16.mxu0 %v1141
    %1246 = vmatpush1.bf16.msra.mxu0 %v1140
    %1247 = vmatprep.subr.bf16.mxu0 %v1137
    %1248 = vmatpush1.bf16.msra.mxu0 %v1136
    %1249 = vmatprep.subr.bf16.mxu0 %v1133
    %1250 = vmatpush1.bf16.msra.mxu0 %v1132
    %1251 = vmatprep.subr.bf16.mxu0 0
    %1252 = vmatpush2.bf16.msra.mxu0 0
    %1253 = vmatprep.subr.bf16.mxu0 0
    %1254 = vmatpush2.bf16.msra.mxu0 0
    %1255 = vmatprep.subr.bf16.mxu0 0
    %1256 = vmatpush2.bf16.msra.mxu0 0
    %1257 = vmatprep.subr.bf16.mxu0 0
    %1258 = vmatpush2.bf16.msra.mxu0 0
    %1259 = vmatprep.subr.bf16.mxu0 0
    %1260 = vmatpush2.bf16.msra.mxu0 0
    %1261 = vmatprep.subr.bf16.mxu0 0
    %1262 = vmatpush2.bf16.msra.mxu0 0
    %1263 = vmatprep.subr.bf16.mxu0 0
    %1264 = vmatpush2.bf16.msra.mxu0 0
    %1265 = vmatprep.subr.bf16.mxu0 0
    %1266 = vmatpush2.bf16.msra.mxu0 0
    %1267 = vmatprep.mubr.bf16.mxu0 0
    %1268 = vmatmul.mubr.bf16.gmra.mxu0 %v993
    %v1269 = vpop.f32.mrf.mxu0
    %v1270 = vadd.f32 0.0, %v1269
    %v1271 = vpop.f32.mrf.mxu0
    %v1272 = vadd.f32 0.0, %v1271
    %v1273 = vpop.f32.mrf.mxu0
    %v1274 = vpop.f32.mrf.mxu0
    %1275 = vdwg.mxu0
    %v1276 = vadd.f32 %v998, %v1229
    %v1277 = vadd.f32 %v999, %v1231
    %v1278 = vadd.f32 %v1000, %v1270
    %v1279 = vadd.f32 %v1001, %v1272
    %v1280 = vxor.u32 %v1276, 2147483648
    %v1281 = vmul.f32 %v1280, 1.442695
    %v1282 = vpow.pop %v1281
    %v1283 = vadd.f32 %v1282, 1.0
    %v1284 = vrcp.pop %v1283
    %v1285 = vmul.f32 1.0, %v1284
    %v1286 = vxor.u32 %v1277, 2147483648
    %v1287 = vmul.f32 %v1286, 1.442695
    %v1288 = vpow.pop %v1287
    %v1289 = vadd.f32 %v1288, 1.0
    %v1290 = vrcp.pop %v1289
    %v1291 = vmul.f32 1.0, %v1290
    %v1292 = vtanh.pop %v1278
    %v1293 = vxor.u32 %v1279, 2147483648
    %v1294 = vmul.f32 %v1293, 1.442695
    %v1295 = vpow.pop %v1294
    %v1296 = vadd.f32 %v1295, 1.0
    %v1297 = vrcp.pop %v1296
    %v1298 = vmul.f32 1.0, %v1297
    %v1299 = vmul.f32 %v1291, %v994
    %v1300 = vmul.f32 %v1285, %v1292
    %v1301 = vadd.f32 %v1299, %v1300
    %v1302 = vtanh.pop %v1301
    %v1303 = vmul.f32 %v1298, %v1302
    %1304 = vst [vmem:[#allocation3] sm:$0xff] %v1301
    %v1305 = vpack.c.bf16 %v1303, %v1303
    %1306 = vst [vmem:[#allocation2] sm:$0xf] %v1305
    %s1307 = scalar_lea.vmem [#allocation9], 12
    %1308 = vst [vmem:[%s1307] sm:$0xf] %v1305
    %v1309 = vld [vmem:[#allocation2] sm:$0xf]
    %v1310 = vld [vmem:[#allocation3] sm:$0xff]
    %s1311 = scalar_lea.vmem [#allocation4], 64
    %v1312 = vld [vmem:[%s1311] sm:$0xff]
    %v1313 = vld [vmem:[%s1311 + $0x8] sm:$0xff]
    %v1314 = vunpack.c.l.bf16 %v1312
    %v1315 = vunpack.c.h.bf16 %v1312
    %v1316 = vunpack.c.l.bf16 %v1313
    %v1317 = vunpack.c.h.bf16 %v1313
    %v1318 = vld [vmem:[#allocation7] sm:$0xff]
    %v1319 = vld [vmem:[#allocation7 + $0x8] sm:$0xff]
    %v1320 = vld [vmem:[#allocation7 + $0x10] sm:$0xff]
    %v1321 = vld [vmem:[#allocation7 + $0x18] sm:$0xff]
    %v1322 = vld [vmem:[#allocation7 + $0x20] sm:$0xff]
    %v1323 = vld [vmem:[#allocation7 + $0x28] sm:$0xff]
    %v1324 = vld [vmem:[#allocation7 + $0x30] sm:$0xff]
    %v1325 = vld [vmem:[#allocation7 + $0x38] sm:$0xff]
    %v1326 = vld [vmem:[#allocation7 + $0x40] sm:$0xff]
    %v1327 = vld [vmem:[#allocation7 + $0x48] sm:$0xff]
    %v1328 = vld [vmem:[#allocation7 + $0x50] sm:$0xff]
    %v1329 = vld [vmem:[#allocation7 + $0x58] sm:$0xff]
    %v1330 = vld [vmem:[#allocation7 + $0x60] sm:$0xff]
    %v1331 = vld [vmem:[#allocation7 + $0x68] sm:$0xff]
    %v1332 = vld [vmem:[#allocation7 + $0x70] sm:$0xff]
    %v1333 = vld [vmem:[#allocation7 + $0x78] sm:$0xff]
    %v1334 = vld [vmem:[#allocation7 + $0x80] sm:$0xff]
    %v1335 = vld [vmem:[#allocation7 + $0x88] sm:$0xff]
    %v1336 = vld [vmem:[#allocation7 + $0x90] sm:$0xff]
    %v1337 = vld [vmem:[#allocation7 + $0x98] sm:$0xff]
    %v1338 = vld [vmem:[#allocation7 + $0xa0] sm:$0xff]
    %v1339 = vld [vmem:[#allocation7 + $0xa8] sm:$0xff]
    %v1340 = vld [vmem:[#allocation7 + $0xb0] sm:$0xff]
    %v1341 = vld [vmem:[#allocation7 + $0xb8] sm:$0xff]
    %v1342 = vld [vmem:[#allocation7 + $0xc0] sm:$0xff]
    %v1343 = vld [vmem:[#allocation7 + $0xc8] sm:$0xff]
    %v1344 = vld [vmem:[#allocation7 + $0xd0] sm:$0xff]
    %v1345 = vld [vmem:[#allocation7 + $0xd8] sm:$0xff]
    %v1346 = vld [vmem:[#allocation7 + $0xe0] sm:$0xff]
    %v1347 = vld [vmem:[#allocation7 + $0xe8] sm:$0xff]
    %v1348 = vld [vmem:[#allocation7 + $0xf0] sm:$0xff]
    %v1349 = vld [vmem:[#allocation7 + $0xf8] sm:$0xff]
    %v1382 = vunpack.c.l.b16 %v1318
    %v1383 = vunpack.c.h.b16 %v1318
    %v1384 = vunpack.c.l.b16 %v1319
    %v1385 = vunpack.c.h.b16 %v1319
    %v1386 = vunpack.c.l.b16 %v1320
    %v1387 = vunpack.c.h.b16 %v1320
    %v1388 = vunpack.c.l.b16 %v1321
    %v1389 = vunpack.c.h.b16 %v1321
    %v1390 = vunpack.c.l.b16 %v1322
    %v1391 = vunpack.c.h.b16 %v1322
    %v1392 = vunpack.c.l.b16 %v1323
    %v1393 = vunpack.c.h.b16 %v1323
    %v1394 = vunpack.c.l.b16 %v1324
    %v1395 = vunpack.c.h.b16 %v1324
    %v1396 = vunpack.c.l.b16 %v1325
    %v1397 = vunpack.c.h.b16 %v1325
    %v1398 = vunpack.c.l.b16 %v1326
    %v1399 = vunpack.c.h.b16 %v1326
    %v1400 = vunpack.c.l.b16 %v1327
    %v1401 = vunpack.c.h.b16 %v1327
    %v1402 = vunpack.c.l.b16 %v1328
    %v1403 = vunpack.c.h.b16 %v1328
    %v1404 = vunpack.c.l.b16 %v1329
    %v1405 = vunpack.c.h.b16 %v1329
    %v1406 = vunpack.c.l.b16 %v1330
    %v1407 = vunpack.c.h.b16 %v1330
    %v1408 = vunpack.c.l.b16 %v1331
    %v1409 = vunpack.c.h.b16 %v1331
    %v1410 = vunpack.c.l.b16 %v1332
    %v1411 = vunpack.c.h.b16 %v1332
    %v1412 = vunpack.c.l.b16 %v1333
    %v1413 = vunpack.c.h.b16 %v1333
    %v1414 = vunpack.c.l.b16 %v1334
    %v1415 = vunpack.c.h.b16 %v1334
    %v1416 = vunpack.c.l.b16 %v1335
    %v1417 = vunpack.c.h.b16 %v1335
    %v1418 = vunpack.c.l.b16 %v1336
    %v1419 = vunpack.c.h.b16 %v1336
    %v1420 = vunpack.c.l.b16 %v1337
    %v1421 = vunpack.c.h.b16 %v1337
    %v1422 = vunpack.c.l.b16 %v1338
    %v1423 = vunpack.c.h.b16 %v1338
    %v1424 = vunpack.c.l.b16 %v1339
    %v1425 = vunpack.c.h.b16 %v1339
    %v1426 = vunpack.c.l.b16 %v1340
    %v1427 = vunpack.c.h.b16 %v1340
    %v1428 = vunpack.c.l.b16 %v1341
    %v1429 = vunpack.c.h.b16 %v1341
    %v1430 = vunpack.c.l.b16 %v1342
    %v1431 = vunpack.c.h.b16 %v1342
    %v1432 = vunpack.c.l.b16 %v1343
    %v1433 = vunpack.c.h.b16 %v1343
    %v1434 = vunpack.c.l.b16 %v1344
    %v1435 = vunpack.c.h.b16 %v1344
    %v1436 = vunpack.c.l.b16 %v1345
    %v1437 = vunpack.c.h.b16 %v1345
    %v1438 = vunpack.c.l.b16 %v1346
    %v1439 = vunpack.c.h.b16 %v1346
    %v1440 = vunpack.c.l.b16 %v1347
    %v1441 = vunpack.c.h.b16 %v1347
    %v1442 = vunpack.c.l.b16 %v1348
    %v1443 = vunpack.c.h.b16 %v1348
    %v1444 = vunpack.c.l.b16 %v1349
    %v1445 = vunpack.c.h.b16 %v1349
    %v1446 = vpack.c.b16 %v1386, %v1382
    %v1447 = vpack.c.b16 %v1387, %v1383
    %v1448 = vpack.c.b16 %v1388, %v1384
    %v1449 = vpack.c.b16 %v1389, %v1385
    %v1450 = vpack.c.b16 %v1394, %v1390
    %v1451 = vpack.c.b16 %v1395, %v1391
    %v1452 = vpack.c.b16 %v1396, %v1392
    %v1453 = vpack.c.b16 %v1397, %v1393
    %v1454 = vpack.c.b16 %v1402, %v1398
    %v1455 = vpack.c.b16 %v1403, %v1399
    %v1456 = vpack.c.b16 %v1404, %v1400
    %v1457 = vpack.c.b16 %v1405, %v1401
    %v1458 = vpack.c.b16 %v1410, %v1406
    %v1459 = vpack.c.b16 %v1411, %v1407
    %v1460 = vpack.c.b16 %v1412, %v1408
    %v1461 = vpack.c.b16 %v1413, %v1409
    %v1462 = vpack.c.b16 %v1418, %v1414
    %v1463 = vpack.c.b16 %v1419, %v1415
    %v1464 = vpack.c.b16 %v1420, %v1416
    %v1465 = vpack.c.b16 %v1421, %v1417
    %v1466 = vpack.c.b16 %v1426, %v1422
    %v1467 = vpack.c.b16 %v1427, %v1423
    %v1468 = vpack.c.b16 %v1428, %v1424
    %v1469 = vpack.c.b16 %v1429, %v1425
    %v1470 = vpack.c.b16 %v1434, %v1430
    %v1471 = vpack.c.b16 %v1435, %v1431
    %v1472 = vpack.c.b16 %v1436, %v1432
    %v1473 = vpack.c.b16 %v1437, %v1433
    %v1474 = vpack.c.b16 %v1442, %v1438
    %v1475 = vpack.c.b16 %v1443, %v1439
    %v1476 = vpack.c.b16 %v1444, %v1440
    %v1477 = vpack.c.b16 %v1445, %v1441
    %1510 = vmatprep.subr.bf16.mxu0 %v1475
    %1511 = vmatpush1.bf16.msra.mxu0 %v1474
    %1512 = vmatprep.subr.bf16.mxu0 %v1471
    %1513 = vmatpush1.bf16.msra.mxu0 %v1470
    %1514 = vmatprep.subr.bf16.mxu0 %v1467
    %1515 = vmatpush1.bf16.msra.mxu0 %v1466
    %1516 = vmatprep.subr.bf16.mxu0 %v1463
    %1517 = vmatpush1.bf16.msra.mxu0 %v1462
    %1518 = vmatprep.subr.bf16.mxu0 %v1459
    %1519 = vmatpush1.bf16.msra.mxu0 %v1458
    %1520 = vmatprep.subr.bf16.mxu0 %v1455
    %1521 = vmatpush1.bf16.msra.mxu0 %v1454
    %1522 = vmatprep.subr.bf16.mxu0 %v1451
    %1523 = vmatpush1.bf16.msra.mxu0 %v1450
    %1524 = vmatprep.subr.bf16.mxu0 %v1447
    %1525 = vmatpush1.bf16.msra.mxu0 %v1446
    %1526 = vmatprep.subr.bf16.mxu0 0
    %1527 = vmatpush2.bf16.msra.mxu0 0
    %1528 = vmatprep.subr.bf16.mxu0 0
    %1529 = vmatpush2.bf16.msra.mxu0 0
    %1530 = vmatprep.subr.bf16.mxu0 0
    %1531 = vmatpush2.bf16.msra.mxu0 0
    %1532 = vmatprep.subr.bf16.mxu0 0
    %1533 = vmatpush2.bf16.msra.mxu0 0
    %1534 = vmatprep.subr.bf16.mxu0 0
    %1535 = vmatpush2.bf16.msra.mxu0 0
    %1536 = vmatprep.subr.bf16.mxu0 0
    %1537 = vmatpush2.bf16.msra.mxu0 0
    %1538 = vmatprep.subr.bf16.mxu0 0
    %1539 = vmatpush2.bf16.msra.mxu0 0
    %1540 = vmatprep.subr.bf16.mxu0 0
    %1541 = vmatpush2.bf16.msra.mxu0 0
    %1542 = vmatprep.mubr.bf16.mxu0 0
    %1543 = vmatmul.mubr.bf16.gmra.mxu0 %v1309
    %v1544 = vpop.f32.mrf.mxu0
    %v1545 = vadd.f32 0.0, %v1544
    %v1546 = vpop.f32.mrf.mxu0
    %v1547 = vadd.f32 0.0, %v1546
    %v1548 = vpop.f32.mrf.mxu0
    %v1549 = vpop.f32.mrf.mxu0
    %1550 = vdwg.mxu0
    %1551 = vmatprep.subr.bf16.mxu0 %v1477
    %1552 = vmatpush1.bf16.msra.mxu0 %v1476
    %1553 = vmatprep.subr.bf16.mxu0 %v1473
    %1554 = vmatpush1.bf16.msra.mxu0 %v1472
    %1555 = vmatprep.subr.bf16.mxu0 %v1469
    %1556 = vmatpush1.bf16.msra.mxu0 %v1468
    %1557 = vmatprep.subr.bf16.mxu0 %v1465
    %1558 = vmatpush1.bf16.msra.mxu0 %v1464
    %1559 = vmatprep.subr.bf16.mxu0 %v1461
    %1560 = vmatpush1.bf16.msra.mxu0 %v1460
    %1561 = vmatprep.subr.bf16.mxu0 %v1457
    %1562 = vmatpush1.bf16.msra.mxu0 %v1456
    %1563 = vmatprep.subr.bf16.mxu0 %v1453
    %1564 = vmatpush1.bf16.msra.mxu0 %v1452
    %1565 = vmatprep.subr.bf16.mxu0 %v1449
    %1566 = vmatpush1.bf16.msra.mxu0 %v1448
    %1567 = vmatprep.subr.bf16.mxu0 0
    %1568 = vmatpush2.bf16.msra.mxu0 0
    %1569 = vmatprep.subr.bf16.mxu0 0
    %1570 = vmatpush2.bf16.msra.mxu0 0
    %1571 = vmatprep.subr.bf16.mxu0 0
    %1572 = vmatpush2.bf16.msra.mxu0 0
    %1573 = vmatprep.subr.bf16.mxu0 0
    %1574 = vmatpush2.bf16.msra.mxu0 0
    %1575 = vmatprep.subr.bf16.mxu0 0
    %1576 = vmatpush2.bf16.msra.mxu0 0
    %1577 = vmatprep.subr.bf16.mxu0 0
    %1578 = vmatpush2.bf16.msra.mxu0 0
    %1579 = vmatprep.subr.bf16.mxu0 0
    %1580 = vmatpush2.bf16.msra.mxu0 0
    %1581 = vmatprep.subr.bf16.mxu0 0
    %1582 = vmatpush2.bf16.msra.mxu0 0
    %1583 = vmatprep.mubr.bf16.mxu0 0
    %1584 = vmatmul.mubr.bf16.gmra.mxu0 %v1309
    %v1585 = vpop.f32.mrf.mxu0
    %v1586 = vadd.f32 0.0, %v1585
    %v1587 = vpop.f32.mrf.mxu0
    %v1588 = vadd.f32 0.0, %v1587
    %v1589 = vpop.f32.mrf.mxu0
    %v1590 = vpop.f32.mrf.mxu0
    %1591 = vdwg.mxu0
    %v1592 = vadd.f32 %v1314, %v1545
    %v1593 = vadd.f32 %v1315, %v1547
    %v1594 = vadd.f32 %v1316, %v1586
    %v1595 = vadd.f32 %v1317, %v1588
    %v1596 = vxor.u32 %v1592, 2147483648
    %v1597 = vmul.f32 %v1596, 1.442695
    %v1598 = vpow.pop %v1597
    %v1599 = vadd.f32 %v1598, 1.0
    %v1600 = vrcp.pop %v1599
    %v1601 = vmul.f32 1.0, %v1600
    %v1602 = vxor.u32 %v1593, 2147483648
    %v1603 = vmul.f32 %v1602, 1.442695
    %v1604 = vpow.pop %v1603
    %v1605 = vadd.f32 %v1604, 1.0
    %v1606 = vrcp.pop %v1605
    %v1607 = vmul.f32 1.0, %v1606
    %v1608 = vtanh.pop %v1594
    %v1609 = vxor.u32 %v1595, 2147483648
    %v1610 = vmul.f32 %v1609, 1.442695
    %v1611 = vpow.pop %v1610
    %v1612 = vadd.f32 %v1611, 1.0
    %v1613 = vrcp.pop %v1612
    %v1614 = vmul.f32 1.0, %v1613
    %v1615 = vmul.f32 %v1607, %v1310
    %v1616 = vmul.f32 %v1601, %v1608
    %v1617 = vadd.f32 %v1615, %v1616
    %v1618 = vtanh.pop %v1617
    %v1619 = vmul.f32 %v1614, %v1618
    %1620 = vst [vmem:[#allocation3] sm:$0xff] %v1617
    %v1621 = vpack.c.bf16 %v1619, %v1619
    %1622 = vst [vmem:[#allocation2] sm:$0xf] %v1621
    %s1623 = scalar_lea.vmem [#allocation9], 16
    %1624 = vst [vmem:[%s1623] sm:$0xf] %v1621
    %v1625 = vld [vmem:[#allocation2] sm:$0xf]
    %v1626 = vld [vmem:[#allocation3] sm:$0xff]
    %s1627 = scalar_lea.vmem [#allocation4], 80
    %v1628 = vld [vmem:[%s1627] sm:$0xff]
    %v1629 = vld [vmem:[%s1627 + $0x8] sm:$0xff]
    %v1630 = vunpack.c.l.bf16 %v1628
    %v1631 = vunpack.c.h.bf16 %v1628
    %v1632 = vunpack.c.l.bf16 %v1629
    %v1633 = vunpack.c.h.bf16 %v1629
    %v1634 = vld [vmem:[#allocation7] sm:$0xff]
    %v1635 = vld [vmem:[#allocation7 + $0x8] sm:$0xff]
    %v1636 = vld [vmem:[#allocation7 + $0x10] sm:$0xff]
    %v1637 = vld [vmem:[#allocation7 + $0x18] sm:$0xff]
    %v1638 = vld [vmem:[#allocation7 + $0x20] sm:$0xff]
    %v1639 = vld [vmem:[#allocation7 + $0x28] sm:$0xff]
    %v1640 = vld [vmem:[#allocation7 + $0x30] sm:$0xff]
    %v1641 = vld [vmem:[#allocation7 + $0x38] sm:$0xff]
    %v1642 = vld [vmem:[#allocation7 + $0x40] sm:$0xff]
    %v1643 = vld [vmem:[#allocation7 + $0x48] sm:$0xff]
    %v1644 = vld [vmem:[#allocation7 + $0x50] sm:$0xff]
    %v1645 = vld [vmem:[#allocation7 + $0x58] sm:$0xff]
    %v1646 = vld [vmem:[#allocation7 + $0x60] sm:$0xff]
    %v1647 = vld [vmem:[#allocation7 + $0x68] sm:$0xff]
    %v1648 = vld [vmem:[#allocation7 + $0x70] sm:$0xff]
    %v1649 = vld [vmem:[#allocation7 + $0x78] sm:$0xff]
    %v1650 = vld [vmem:[#allocation7 + $0x80] sm:$0xff]
    %v1651 = vld [vmem:[#allocation7 + $0x88] sm:$0xff]
    %v1652 = vld [vmem:[#allocation7 + $0x90] sm:$0xff]
    %v1653 = vld [vmem:[#allocation7 + $0x98] sm:$0xff]
    %v1654 = vld [vmem:[#allocation7 + $0xa0] sm:$0xff]
    %v1655 = vld [vmem:[#allocation7 + $0xa8] sm:$0xff]
    %v1656 = vld [vmem:[#allocation7 + $0xb0] sm:$0xff]
    %v1657 = vld [vmem:[#allocation7 + $0xb8] sm:$0xff]
    %v1658 = vld [vmem:[#allocation7 + $0xc0] sm:$0xff]
    %v1659 = vld [vmem:[#allocation7 + $0xc8] sm:$0xff]
    %v1660 = vld [vmem:[#allocation7 + $0xd0] sm:$0xff]
    %v1661 = vld [vmem:[#allocation7 + $0xd8] sm:$0xff]
    %v1662 = vld [vmem:[#allocation7 + $0xe0] sm:$0xff]
    %v1663 = vld [vmem:[#allocation7 + $0xe8] sm:$0xff]
    %v1664 = vld [vmem:[#allocation7 + $0xf0] sm:$0xff]
    %v1665 = vld [vmem:[#allocation7 + $0xf8] sm:$0xff]
    %v1698 = vunpack.c.l.b16 %v1634
    %v1699 = vunpack.c.h.b16 %v1634
    %v1700 = vunpack.c.l.b16 %v1635
    %v1701 = vunpack.c.h.b16 %v1635
    %v1702 = vunpack.c.l.b16 %v1636
    %v1703 = vunpack.c.h.b16 %v1636
    %v1704 = vunpack.c.l.b16 %v1637
    %v1705 = vunpack.c.h.b16 %v1637
    %v1706 = vunpack.c.l.b16 %v1638
    %v1707 = vunpack.c.h.b16 %v1638
    %v1708 = vunpack.c.l.b16 %v1639
    %v1709 = vunpack.c.h.b16 %v1639
    %v1710 = vunpack.c.l.b16 %v1640
    %v1711 = vunpack.c.h.b16 %v1640
    %v1712 = vunpack.c.l.b16 %v1641
    %v1713 = vunpack.c.h.b16 %v1641
    %v1714 = vunpack.c.l.b16 %v1642
    %v1715 = vunpack.c.h.b16 %v1642
    %v1716 = vunpack.c.l.b16 %v1643
    %v1717 = vunpack.c.h.b16 %v1643
    %v1718 = vunpack.c.l.b16 %v1644
    %v1719 = vunpack.c.h.b16 %v1644
    %v1720 = vunpack.c.l.b16 %v1645
    %v1721 = vunpack.c.h.b16 %v1645
    %v1722 = vunpack.c.l.b16 %v1646
    %v1723 = vunpack.c.h.b16 %v1646
    %v1724 = vunpack.c.l.b16 %v1647
    %v1725 = vunpack.c.h.b16 %v1647
    %v1726 = vunpack.c.l.b16 %v1648
    %v1727 = vunpack.c.h.b16 %v1648
    %v1728 = vunpack.c.l.b16 %v1649
    %v1729 = vunpack.c.h.b16 %v1649
    %v1730 = vunpack.c.l.b16 %v1650
    %v1731 = vunpack.c.h.b16 %v1650
    %v1732 = vunpack.c.l.b16 %v1651
    %v1733 = vunpack.c.h.b16 %v1651
    %v1734 = vunpack.c.l.b16 %v1652
    %v1735 = vunpack.c.h.b16 %v1652
    %v1736 = vunpack.c.l.b16 %v1653
    %v1737 = vunpack.c.h.b16 %v1653
    %v1738 = vunpack.c.l.b16 %v1654
    %v1739 = vunpack.c.h.b16 %v1654
    %v1740 = vunpack.c.l.b16 %v1655
    %v1741 = vunpack.c.h.b16 %v1655
    %v1742 = vunpack.c.l.b16 %v1656
    %v1743 = vunpack.c.h.b16 %v1656
    %v1744 = vunpack.c.l.b16 %v1657
    %v1745 = vunpack.c.h.b16 %v1657
    %v1746 = vunpack.c.l.b16 %v1658
    %v1747 = vunpack.c.h.b16 %v1658
    %v1748 = vunpack.c.l.b16 %v1659
    %v1749 = vunpack.c.h.b16 %v1659
    %v1750 = vunpack.c.l.b16 %v1660
    %v1751 = vunpack.c.h.b16 %v1660
    %v1752 = vunpack.c.l.b16 %v1661
    %v1753 = vunpack.c.h.b16 %v1661
    %v1754 = vunpack.c.l.b16 %v1662
    %v1755 = vunpack.c.h.b16 %v1662
    %v1756 = vunpack.c.l.b16 %v1663
    %v1757 = vunpack.c.h.b16 %v1663
    %v1758 = vunpack.c.l.b16 %v1664
    %v1759 = vunpack.c.h.b16 %v1664
    %v1760 = vunpack.c.l.b16 %v1665
    %v1761 = vunpack.c.h.b16 %v1665
    %v1762 = vpack.c.b16 %v1702, %v1698
    %v1763 = vpack.c.b16 %v1703, %v1699
    %v1764 = vpack.c.b16 %v1704, %v1700
    %v1765 = vpack.c.b16 %v1705, %v1701
    %v1766 = vpack.c.b16 %v1710, %v1706
    %v1767 = vpack.c.b16 %v1711, %v1707
    %v1768 = vpack.c.b16 %v1712, %v1708
    %v1769 = vpack.c.b16 %v1713, %v1709
    %v1770 = vpack.c.b16 %v1718, %v1714
    %v1771 = vpack.c.b16 %v1719, %v1715
    %v1772 = vpack.c.b16 %v1720, %v1716
    %v1773 = vpack.c.b16 %v1721, %v1717
    %v1774 = vpack.c.b16 %v1726, %v1722
    %v1775 = vpack.c.b16 %v1727, %v1723
    %v1776 = vpack.c.b16 %v1728, %v1724
    %v1777 = vpack.c.b16 %v1729, %v1725
    %v1778 = vpack.c.b16 %v1734, %v1730
    %v1779 = vpack.c.b16 %v1735, %v1731
    %v1780 = vpack.c.b16 %v1736, %v1732
    %v1781 = vpack.c.b16 %v1737, %v1733
    %v1782 = vpack.c.b16 %v1742, %v1738
    %v1783 = vpack.c.b16 %v1743, %v1739
    %v1784 = vpack.c.b16 %v1744, %v1740
    %v1785 = vpack.c.b16 %v1745, %v1741
    %v1786 = vpack.c.b16 %v1750, %v1746
    %v1787 = vpack.c.b16 %v1751, %v1747
    %v1788 = vpack.c.b16 %v1752, %v1748
    %v1789 = vpack.c.b16 %v1753, %v1749
    %v1790 = vpack.c.b16 %v1758, %v1754
    %v1791 = vpack.c.b16 %v1759, %v1755
    %v1792 = vpack.c.b16 %v1760, %v1756
    %v1793 = vpack.c.b16 %v1761, %v1757
    %1826 = vmatprep.subr.bf16.mxu0 %v1791
    %1827 = vmatpush1.bf16.msra.mxu0 %v1790
    %1828 = vmatprep.subr.bf16.mxu0 %v1787
    %1829 = vmatpush1.bf16.msra.mxu0 %v1786
    %1830 = vmatprep.subr.bf16.mxu0 %v1783
    %1831 = vmatpush1.bf16.msra.mxu0 %v1782
    %1832 = vmatprep.subr.bf16.mxu0 %v1779
    %1833 = vmatpush1.bf16.msra.mxu0 %v1778
    %1834 = vmatprep.subr.bf16.mxu0 %v1775
    %1835 = vmatpush1.bf16.msra.mxu0 %v1774
    %1836 = vmatprep.subr.bf16.mxu0 %v1771
    %1837 = vmatpush1.bf16.msra.mxu0 %v1770
    %1838 = vmatprep.subr.bf16.mxu0 %v1767
    %1839 = vmatpush1.bf16.msra.mxu0 %v1766
    %1840 = vmatprep.subr.bf16.mxu0 %v1763
    %1841 = vmatpush1.bf16.msra.mxu0 %v1762
    %1842 = vmatprep.subr.bf16.mxu0 0
    %1843 = vmatpush2.bf16.msra.mxu0 0
    %1844 = vmatprep.subr.bf16.mxu0 0
    %1845 = vmatpush2.bf16.msra.mxu0 0
    %1846 = vmatprep.subr.bf16.mxu0 0
    %1847 = vmatpush2.bf16.msra.mxu0 0
    %1848 = vmatprep.subr.bf16.mxu0 0
    %1849 = vmatpush2.bf16.msra.mxu0 0
    %1850 = vmatprep.subr.bf16.mxu0 0
    %1851 = vmatpush2.bf16.msra.mxu0 0
    %1852 = vmatprep.subr.bf16.mxu0 0
    %1853 = vmatpush2.bf16.msra.mxu0 0
    %1854 = vmatprep.subr.bf16.mxu0 0
    %1855 = vmatpush2.bf16.msra.mxu0 0
    %1856 = vmatprep.subr.bf16.mxu0 0
    %1857 = vmatpush2.bf16.msra.mxu0 0
    %1858 = vmatprep.mubr.bf16.mxu0 0
    %1859 = vmatmul.mubr.bf16.gmra.mxu0 %v1625
    %v1860 = vpop.f32.mrf.mxu0
    %v1861 = vadd.f32 0.0, %v1860
    %v1862 = vpop.f32.mrf.mxu0
    %v1863 = vadd.f32 0.0, %v1862
    %v1864 = vpop.f32.mrf.mxu0
    %v1865 = vpop.f32.mrf.mxu0
    %1866 = vdwg.mxu0
    %1867 = vmatprep.subr.bf16.mxu0 %v1793
    %1868 = vmatpush1.bf16.msra.mxu0 %v1792
    %1869 = vmatprep.subr.bf16.mxu0 %v1789
    %1870 = vmatpush1.bf16.msra.mxu0 %v1788
    %1871 = vmatprep.subr.bf16.mxu0 %v1785
    %1872 = vmatpush1.bf16.msra.mxu0 %v1784
    %1873 = vmatprep.subr.bf16.mxu0 %v1781
    %1874 = vmatpush1.bf16.msra.mxu0 %v1780
    %1875 = vmatprep.subr.bf16.mxu0 %v1777
    %1876 = vmatpush1.bf16.msra.mxu0 %v1776
    %1877 = vmatprep.subr.bf16.mxu0 %v1773
    %1878 = vmatpush1.bf16.msra.mxu0 %v1772
    %1879 = vmatprep.subr.bf16.mxu0 %v1769
    %1880 = vmatpush1.bf16.msra.mxu0 %v1768
    %1881 = vmatprep.subr.bf16.mxu0 %v1765
    %1882 = vmatpush1.bf16.msra.mxu0 %v1764
    %1883 = vmatprep.subr.bf16.mxu0 0
    %1884 = vmatpush2.bf16.msra.mxu0 0
    %1885 = vmatprep.subr.bf16.mxu0 0
    %1886 = vmatpush2.bf16.msra.mxu0 0
    %1887 = vmatprep.subr.bf16.mxu0 0
    %1888 = vmatpush2.bf16.msra.mxu0 0
    %1889 = vmatprep.subr.bf16.mxu0 0
    %1890 = vmatpush2.bf16.msra.mxu0 0
    %1891 = vmatprep.subr.bf16.mxu0 0
    %1892 = vmatpush2.bf16.msra.mxu0 0
    %1893 = vmatprep.subr.bf16.mxu0 0
    %1894 = vmatpush2.bf16.msra.mxu0 0
    %1895 = vmatprep.subr.bf16.mxu0 0
    %1896 = vmatpush2.bf16.msra.mxu0 0
    %1897 = vmatprep.subr.bf16.mxu0 0
    %1898 = vmatpush2.bf16.msra.mxu0 0
    %1899 = vmatprep.mubr.bf16.mxu0 0
    %1900 = vmatmul.mubr.bf16.gmra.mxu0 %v1625
    %v1901 = vpop.f32.mrf.mxu0
    %v1902 = vadd.f32 0.0, %v1901
    %v1903 = vpop.f32.mrf.mxu0
    %v1904 = vadd.f32 0.0, %v1903
    %v1905 = vpop.f32.mrf.mxu0
    %v1906 = vpop.f32.mrf.mxu0
    %1907 = vdwg.mxu0
    %v1908 = vadd.f32 %v1630, %v1861
    %v1909 = vadd.f32 %v1631, %v1863
    %v1910 = vadd.f32 %v1632, %v1902
    %v1911 = vadd.f32 %v1633, %v1904
    %v1912 = vxor.u32 %v1908, 2147483648
    %v1913 = vmul.f32 %v1912, 1.442695
    %v1914 = vpow.pop %v1913
    %v1915 = vadd.f32 %v1914, 1.0
    %v1916 = vrcp.pop %v1915
    %v1917 = vmul.f32 1.0, %v1916
    %v1918 = vxor.u32 %v1909, 2147483648
    %v1919 = vmul.f32 %v1918, 1.442695
    %v1920 = vpow.pop %v1919
    %v1921 = vadd.f32 %v1920, 1.0
    %v1922 = vrcp.pop %v1921
    %v1923 = vmul.f32 1.0, %v1922
    %v1924 = vtanh.pop %v1910
    %v1925 = vxor.u32 %v1911, 2147483648
    %v1926 = vmul.f32 %v1925, 1.442695
    %v1927 = vpow.pop %v1926
    %v1928 = vadd.f32 %v1927, 1.0
    %v1929 = vrcp.pop %v1928
    %v1930 = vmul.f32 1.0, %v1929
    %v1931 = vmul.f32 %v1923, %v1626
    %v1932 = vmul.f32 %v1917, %v1924
    %v1933 = vadd.f32 %v1931, %v1932
    %v1934 = vtanh.pop %v1933
    %v1935 = vmul.f32 %v1930, %v1934
    %1936 = vst [vmem:[#allocation3] sm:$0xff] %v1933
    %v1937 = vpack.c.bf16 %v1935, %v1935
    %1938 = vst [vmem:[#allocation2] sm:$0xf] %v1937
    %s1939 = scalar_lea.vmem [#allocation9], 20
    %1940 = vst [vmem:[%s1939] sm:$0xf] %v1937
    %v1941 = vld [vmem:[#allocation2] sm:$0xf]
    %v1942 = vld [vmem:[#allocation3] sm:$0xff]
    %s1943 = scalar_lea.vmem [#allocation4], 96
    %v1944 = vld [vmem:[%s1943] sm:$0xff]
    %v1945 = vld [vmem:[%s1943 + $0x8] sm:$0xff]
    %v1946 = vunpack.c.l.bf16 %v1944
    %v1947 = vunpack.c.h.bf16 %v1944
    %v1948 = vunpack.c.l.bf16 %v1945
    %v1949 = vunpack.c.h.bf16 %v1945
    %v1950 = vld [vmem:[#allocation7] sm:$0xff]
    %v1951 = vld [vmem:[#allocation7 + $0x8] sm:$0xff]
    %v1952 = vld [vmem:[#allocation7 + $0x10] sm:$0xff]
    %v1953 = vld [vmem:[#allocation7 + $0x18] sm:$0xff]
    %v1954 = vld [vmem:[#allocation7 + $0x20] sm:$0xff]
    %v1955 = vld [vmem:[#allocation7 + $0x28] sm:$0xff]
    %v1956 = vld [vmem:[#allocation7 + $0x30] sm:$0xff]
    %v1957 = vld [vmem:[#allocation7 + $0x38] sm:$0xff]
    %v1958 = vld [vmem:[#allocation7 + $0x40] sm:$0xff]
    %v1959 = vld [vmem:[#allocation7 + $0x48] sm:$0xff]
    %v1960 = vld [vmem:[#allocation7 + $0x50] sm:$0xff]
    %v1961 = vld [vmem:[#allocation7 + $0x58] sm:$0xff]
    %v1962 = vld [vmem:[#allocation7 + $0x60] sm:$0xff]
    %v1963 = vld [vmem:[#allocation7 + $0x68] sm:$0xff]
    %v1964 = vld [vmem:[#allocation7 + $0x70] sm:$0xff]
    %v1965 = vld [vmem:[#allocation7 + $0x78] sm:$0xff]
    %v1966 = vld [vmem:[#allocation7 + $0x80] sm:$0xff]
    %v1967 = vld [vmem:[#allocation7 + $0x88] sm:$0xff]
    %v1968 = vld [vmem:[#allocation7 + $0x90] sm:$0xff]
    %v1969 = vld [vmem:[#allocation7 + $0x98] sm:$0xff]
    %v1970 = vld [vmem:[#allocation7 + $0xa0] sm:$0xff]
    %v1971 = vld [vmem:[#allocation7 + $0xa8] sm:$0xff]
    %v1972 = vld [vmem:[#allocation7 + $0xb0] sm:$0xff]
    %v1973 = vld [vmem:[#allocation7 + $0xb8] sm:$0xff]
    %v1974 = vld [vmem:[#allocation7 + $0xc0] sm:$0xff]
    %v1975 = vld [vmem:[#allocation7 + $0xc8] sm:$0xff]
    %v1976 = vld [vmem:[#allocation7 + $0xd0] sm:$0xff]
    %v1977 = vld [vmem:[#allocation7 + $0xd8] sm:$0xff]
    %v1978 = vld [vmem:[#allocation7 + $0xe0] sm:$0xff]
    %v1979 = vld [vmem:[#allocation7 + $0xe8] sm:$0xff]
    %v1980 = vld [vmem:[#allocation7 + $0xf0] sm:$0xff]
    %v1981 = vld [vmem:[#allocation7 + $0xf8] sm:$0xff]
    %v2014 = vunpack.c.l.b16 %v1950
    %v2015 = vunpack.c.h.b16 %v1950
    %v2016 = vunpack.c.l.b16 %v1951
    %v2017 = vunpack.c.h.b16 %v1951
    %v2018 = vunpack.c.l.b16 %v1952
    %v2019 = vunpack.c.h.b16 %v1952
    %v2020 = vunpack.c.l.b16 %v1953
    %v2021 = vunpack.c.h.b16 %v1953
    %v2022 = vunpack.c.l.b16 %v1954
    %v2023 = vunpack.c.h.b16 %v1954
    %v2024 = vunpack.c.l.b16 %v1955
    %v2025 = vunpack.c.h.b16 %v1955
    %v2026 = vunpack.c.l.b16 %v1956
    %v2027 = vunpack.c.h.b16 %v1956
    %v2028 = vunpack.c.l.b16 %v1957
    %v2029 = vunpack.c.h.b16 %v1957
    %v2030 = vunpack.c.l.b16 %v1958
    %v2031 = vunpack.c.h.b16 %v1958
    %v2032 = vunpack.c.l.b16 %v1959
    %v2033 = vunpack.c.h.b16 %v1959
    %v2034 = vunpack.c.l.b16 %v1960
    %v2035 = vunpack.c.h.b16 %v1960
    %v2036 = vunpack.c.l.b16 %v1961
    %v2037 = vunpack.c.h.b16 %v1961
    %v2038 = vunpack.c.l.b16 %v1962
    %v2039 = vunpack.c.h.b16 %v1962
    %v2040 = vunpack.c.l.b16 %v1963
    %v2041 = vunpack.c.h.b16 %v1963
    %v2042 = vunpack.c.l.b16 %v1964
    %v2043 = vunpack.c.h.b16 %v1964
    %v2044 = vunpack.c.l.b16 %v1965
    %v2045 = vunpack.c.h.b16 %v1965
    %v2046 = vunpack.c.l.b16 %v1966
    %v2047 = vunpack.c.h.b16 %v1966
    %v2048 = vunpack.c.l.b16 %v1967
    %v2049 = vunpack.c.h.b16 %v1967
    %v2050 = vunpack.c.l.b16 %v1968
    %v2051 = vunpack.c.h.b16 %v1968
    %v2052 = vunpack.c.l.b16 %v1969
    %v2053 = vunpack.c.h.b16 %v1969
    %v2054 = vunpack.c.l.b16 %v1970
    %v2055 = vunpack.c.h.b16 %v1970
    %v2056 = vunpack.c.l.b16 %v1971
    %v2057 = vunpack.c.h.b16 %v1971
    %v2058 = vunpack.c.l.b16 %v1972
    %v2059 = vunpack.c.h.b16 %v1972
    %v2060 = vunpack.c.l.b16 %v1973
    %v2061 = vunpack.c.h.b16 %v1973
    %v2062 = vunpack.c.l.b16 %v1974
    %v2063 = vunpack.c.h.b16 %v1974
    %v2064 = vunpack.c.l.b16 %v1975
    %v2065 = vunpack.c.h.b16 %v1975
    %v2066 = vunpack.c.l.b16 %v1976
    %v2067 = vunpack.c.h.b16 %v1976
    %v2068 = vunpack.c.l.b16 %v1977
    %v2069 = vunpack.c.h.b16 %v1977
    %v2070 = vunpack.c.l.b16 %v1978
    %v2071 = vunpack.c.h.b16 %v1978
    %v2072 = vunpack.c.l.b16 %v1979
    %v2073 = vunpack.c.h.b16 %v1979
    %v2074 = vunpack.c.l.b16 %v1980
    %v2075 = vunpack.c.h.b16 %v1980
    %v2076 = vunpack.c.l.b16 %v1981
    %v2077 = vunpack.c.h.b16 %v1981
    %v2078 = vpack.c.b16 %v2018, %v2014
    %v2079 = vpack.c.b16 %v2019, %v2015
    %v2080 = vpack.c.b16 %v2020, %v2016
    %v2081 = vpack.c.b16 %v2021, %v2017
    %v2082 = vpack.c.b16 %v2026, %v2022
    %v2083 = vpack.c.b16 %v2027, %v2023
    %v2084 = vpack.c.b16 %v2028, %v2024
    %v2085 = vpack.c.b16 %v2029, %v2025
    %v2086 = vpack.c.b16 %v2034, %v2030
    %v2087 = vpack.c.b16 %v2035, %v2031
    %v2088 = vpack.c.b16 %v2036, %v2032
    %v2089 = vpack.c.b16 %v2037, %v2033
    %v2090 = vpack.c.b16 %v2042, %v2038
    %v2091 = vpack.c.b16 %v2043, %v2039
    %v2092 = vpack.c.b16 %v2044, %v2040
    %v2093 = vpack.c.b16 %v2045, %v2041
    %v2094 = vpack.c.b16 %v2050, %v2046
    %v2095 = vpack.c.b16 %v2051, %v2047
    %v2096 = vpack.c.b16 %v2052, %v2048
    %v2097 = vpack.c.b16 %v2053, %v2049
    %v2098 = vpack.c.b16 %v2058, %v2054
    %v2099 = vpack.c.b16 %v2059, %v2055
    %v2100 = vpack.c.b16 %v2060, %v2056
    %v2101 = vpack.c.b16 %v2061, %v2057
    %v2102 = vpack.c.b16 %v2066, %v2062
    %v2103 = vpack.c.b16 %v2067, %v2063
    %v2104 = vpack.c.b16 %v2068, %v2064
    %v2105 = vpack.c.b16 %v2069, %v2065
    %v2106 = vpack.c.b16 %v2074, %v2070
    %v2107 = vpack.c.b16 %v2075, %v2071
    %v2108 = vpack.c.b16 %v2076, %v2072
    %v2109 = vpack.c.b16 %v2077, %v2073
    %2142 = vmatprep.subr.bf16.mxu0 %v2107
    %2143 = vmatpush1.bf16.msra.mxu0 %v2106
    %2144 = vmatprep.subr.bf16.mxu0 %v2103
    %2145 = vmatpush1.bf16.msra.mxu0 %v2102
    %2146 = vmatprep.subr.bf16.mxu0 %v2099
    %2147 = vmatpush1.bf16.msra.mxu0 %v2098
    %2148 = vmatprep.subr.bf16.mxu0 %v2095
    %2149 = vmatpush1.bf16.msra.mxu0 %v2094
    %2150 = vmatprep.subr.bf16.mxu0 %v2091
    %2151 = vmatpush1.bf16.msra.mxu0 %v2090
    %2152 = vmatprep.subr.bf16.mxu0 %v2087
    %2153 = vmatpush1.bf16.msra.mxu0 %v2086
    %2154 = vmatprep.subr.bf16.mxu0 %v2083
    %2155 = vmatpush1.bf16.msra.mxu0 %v2082
    %2156 = vmatprep.subr.bf16.mxu0 %v2079
    %2157 = vmatpush1.bf16.msra.mxu0 %v2078
    %2158 = vmatprep.subr.bf16.mxu0 0
    %2159 = vmatpush2.bf16.msra.mxu0 0
    %2160 = vmatprep.subr.bf16.mxu0 0
    %2161 = vmatpush2.bf16.msra.mxu0 0
    %2162 = vmatprep.subr.bf16.mxu0 0
    %2163 = vmatpush2.bf16.msra.mxu0 0
    %2164 = vmatprep.subr.bf16.mxu0 0
    %2165 = vmatpush2.bf16.msra.mxu0 0
    %2166 = vmatprep.subr.bf16.mxu0 0
    %2167 = vmatpush2.bf16.msra.mxu0 0
    %2168 = vmatprep.subr.bf16.mxu0 0
    %2169 = vmatpush2.bf16.msra.mxu0 0
    %2170 = vmatprep.subr.bf16.mxu0 0
    %2171 = vmatpush2.bf16.msra.mxu0 0
    %2172 = vmatprep.subr.bf16.mxu0 0
    %2173 = vmatpush2.bf16.msra.mxu0 0
    %2174 = vmatprep.mubr.bf16.mxu0 0
    %2175 = vmatmul.mubr.bf16.gmra.mxu0 %v1941
    %v2176 = vpop.f32.mrf.mxu0
    %v2177 = vadd.f32 0.0, %v2176
    %v2178 = vpop.f32.mrf.mxu0
    %v2179 = vadd.f32 0.0, %v2178
    %v2180 = vpop.f32.mrf.mxu0
    %v2181 = vpop.f32.mrf.mxu0
    %2182 = vdwg.mxu0
    %2183 = vmatprep.subr.bf16.mxu0 %v2109
    %2184 = vmatpush1.bf16.msra.mxu0 %v2108
    %2185 = vmatprep.subr.bf16.mxu0 %v2105
    %2186 = vmatpush1.bf16.msra.mxu0 %v2104
    %2187 = vmatprep.subr.bf16.mxu0 %v2101
    %2188 = vmatpush1.bf16.msra.mxu0 %v2100
    %2189 = vmatprep.subr.bf16.mxu0 %v2097
    %2190 = vmatpush1.bf16.msra.mxu0 %v2096
    %2191 = vmatprep.subr.bf16.mxu0 %v2093
    %2192 = vmatpush1.bf16.msra.mxu0 %v2092
    %2193 = vmatprep.subr.bf16.mxu0 %v2089
    %2194 = vmatpush1.bf16.msra.mxu0 %v2088
    %2195 = vmatprep.subr.bf16.mxu0 %v2085
    %2196 = vmatpush1.bf16.msra.mxu0 %v2084
    %2197 = vmatprep.subr.bf16.mxu0 %v2081
    %2198 = vmatpush1.bf16.msra.mxu0 %v2080
    %2199 = vmatprep.subr.bf16.mxu0 0
    %2200 = vmatpush2.bf16.msra.mxu0 0
    %2201 = vmatprep.subr.bf16.mxu0 0
    %2202 = vmatpush2.bf16.msra.mxu0 0
    %2203 = vmatprep.subr.bf16.mxu0 0
    %2204 = vmatpush2.bf16.msra.mxu0 0
    %2205 = vmatprep.subr.bf16.mxu0 0
    %2206 = vmatpush2.bf16.msra.mxu0 0
    %2207 = vmatprep.subr.bf16.mxu0 0
    %2208 = vmatpush2.bf16.msra.mxu0 0
    %2209 = vmatprep.subr.bf16.mxu0 0
    %2210 = vmatpush2.bf16.msra.mxu0 0
    %2211 = vmatprep.subr.bf16.mxu0 0
    %2212 = vmatpush2.bf16.msra.mxu0 0
    %2213 = vmatprep.subr.bf16.mxu0 0
    %2214 = vmatpush2.bf16.msra.mxu0 0
    %2215 = vmatprep.mubr.bf16.mxu0 0
    %2216 = vmatmul.mubr.bf16.gmra.mxu0 %v1941
    %v2217 = vpop.f32.mrf.mxu0
    %v2218 = vadd.f32 0.0, %v2217
    %v2219 = vpop.f32.mrf.mxu0
    %v2220 = vadd.f32 0.0, %v2219
    %v2221 = vpop.f32.mrf.mxu0
    %v2222 = vpop.f32.mrf.mxu0
    %2223 = vdwg.mxu0
    %v2224 = vadd.f32 %v1946, %v2177
    %v2225 = vadd.f32 %v1947, %v2179
    %v2226 = vadd.f32 %v1948, %v2218
    %v2227 = vadd.f32 %v1949, %v2220
    %v2228 = vxor.u32 %v2224, 2147483648
    %v2229 = vmul.f32 %v2228, 1.442695
    %v2230 = vpow.pop %v2229
    %v2231 = vadd.f32 %v2230, 1.0
    %v2232 = vrcp.pop %v2231
    %v2233 = vmul.f32 1.0, %v2232
    %v2234 = vxor.u32 %v2225, 2147483648
    %v2235 = vmul.f32 %v2234, 1.442695
    %v2236 = vpow.pop %v2235
    %v2237 = vadd.f32 %v2236, 1.0
    %v2238 = vrcp.pop %v2237
    %v2239 = vmul.f32 1.0, %v2238
    %v2240 = vtanh.pop %v2226
    %v2241 = vxor.u32 %v2227, 2147483648
    %v2242 = vmul.f32 %v2241, 1.442695
    %v2243 = vpow.pop %v2242
    %v2244 = vadd.f32 %v2243, 1.0
    %v2245 = vrcp.pop %v2244
    %v2246 = vmul.f32 1.0, %v2245
    %v2247 = vmul.f32 %v2239, %v1942
    %v2248 = vmul.f32 %v2233, %v2240
    %v2249 = vadd.f32 %v2247, %v2248
    %v2250 = vtanh.pop %v2249
    %v2251 = vmul.f32 %v2246, %v2250
    %2252 = vst [vmem:[#allocation3] sm:$0xff] %v2249
    %v2253 = vpack.c.bf16 %v2251, %v2251
    %2254 = vst [vmem:[#allocation2] sm:$0xf] %v2253
    %s2255 = scalar_lea.vmem [#allocation9], 24
    %2256 = vst [vmem:[%s2255] sm:$0xf] %v2253
    %v2257 = vld [vmem:[#allocation2] sm:$0xf]
    %v2258 = vld [vmem:[#allocation3] sm:$0xff]
    %s2259 = scalar_lea.vmem [#allocation4], 112
    %v2260 = vld [vmem:[%s2259] sm:$0xff]
    %v2261 = vld [vmem:[%s2259 + $0x8] sm:$0xff]
    %v2262 = vunpack.c.l.bf16 %v2260
    %v2263 = vunpack.c.h.bf16 %v2260
    %v2264 = vunpack.c.l.bf16 %v2261
    %v2265 = vunpack.c.h.bf16 %v2261
    %v2266 = vld [vmem:[#allocation7] sm:$0xff]
    %v2267 = vld [vmem:[#allocation7 + $0x8] sm:$0xff]
    %v2268 = vld [vmem:[#allocation7 + $0x10] sm:$0xff]
    %v2269 = vld [vmem:[#allocation7 + $0x18] sm:$0xff]
    %v2270 = vld [vmem:[#allocation7 + $0x20] sm:$0xff]
    %v2271 = vld [vmem:[#allocation7 + $0x28] sm:$0xff]
    %v2272 = vld [vmem:[#allocation7 + $0x30] sm:$0xff]
    %v2273 = vld [vmem:[#allocation7 + $0x38] sm:$0xff]
    %v2274 = vld [vmem:[#allocation7 + $0x40] sm:$0xff]
    %v2275 = vld [vmem:[#allocation7 + $0x48] sm:$0xff]
    %v2276 = vld [vmem:[#allocation7 + $0x50] sm:$0xff]
    %v2277 = vld [vmem:[#allocation7 + $0x58] sm:$0xff]
    %v2278 = vld [vmem:[#allocation7 + $0x60] sm:$0xff]
    %v2279 = vld [vmem:[#allocation7 + $0x68] sm:$0xff]
    %v2280 = vld [vmem:[#allocation7 + $0x70] sm:$0xff]
    %v2281 = vld [vmem:[#allocation7 + $0x78] sm:$0xff]
    %v2282 = vld [vmem:[#allocation7 + $0x80] sm:$0xff]
    %v2283 = vld [vmem:[#allocation7 + $0x88] sm:$0xff]
    %v2284 = vld [vmem:[#allocation7 + $0x90] sm:$0xff]
    %v2285 = vld [vmem:[#allocation7 + $0x98] sm:$0xff]
    %v2286 = vld [vmem:[#allocation7 + $0xa0] sm:$0xff]
    %v2287 = vld [vmem:[#allocation7 + $0xa8] sm:$0xff]
    %v2288 = vld [vmem:[#allocation7 + $0xb0] sm:$0xff]
    %v2289 = vld [vmem:[#allocation7 + $0xb8] sm:$0xff]
    %v2290 = vld [vmem:[#allocation7 + $0xc0] sm:$0xff]
    %v2291 = vld [vmem:[#allocation7 + $0xc8] sm:$0xff]
    %v2292 = vld [vmem:[#allocation7 + $0xd0] sm:$0xff]
    %v2293 = vld [vmem:[#allocation7 + $0xd8] sm:$0xff]
    %v2294 = vld [vmem:[#allocation7 + $0xe0] sm:$0xff]
    %v2295 = vld [vmem:[#allocation7 + $0xe8] sm:$0xff]
    %v2296 = vld [vmem:[#allocation7 + $0xf0] sm:$0xff]
    %v2297 = vld [vmem:[#allocation7 + $0xf8] sm:$0xff]
    %v2330 = vunpack.c.l.b16 %v2266
    %v2331 = vunpack.c.h.b16 %v2266
    %v2332 = vunpack.c.l.b16 %v2267
    %v2333 = vunpack.c.h.b16 %v2267
    %v2334 = vunpack.c.l.b16 %v2268
    %v2335 = vunpack.c.h.b16 %v2268
    %v2336 = vunpack.c.l.b16 %v2269
    %v2337 = vunpack.c.h.b16 %v2269
    %v2338 = vunpack.c.l.b16 %v2270
    %v2339 = vunpack.c.h.b16 %v2270
    %v2340 = vunpack.c.l.b16 %v2271
    %v2341 = vunpack.c.h.b16 %v2271
    %v2342 = vunpack.c.l.b16 %v2272
    %v2343 = vunpack.c.h.b16 %v2272
    %v2344 = vunpack.c.l.b16 %v2273
    %v2345 = vunpack.c.h.b16 %v2273
    %v2346 = vunpack.c.l.b16 %v2274
    %v2347 = vunpack.c.h.b16 %v2274
    %v2348 = vunpack.c.l.b16 %v2275
    %v2349 = vunpack.c.h.b16 %v2275
    %v2350 = vunpack.c.l.b16 %v2276
    %v2351 = vunpack.c.h.b16 %v2276
    %v2352 = vunpack.c.l.b16 %v2277
    %v2353 = vunpack.c.h.b16 %v2277
    %v2354 = vunpack.c.l.b16 %v2278
    %v2355 = vunpack.c.h.b16 %v2278
    %v2356 = vunpack.c.l.b16 %v2279
    %v2357 = vunpack.c.h.b16 %v2279
    %v2358 = vunpack.c.l.b16 %v2280
    %v2359 = vunpack.c.h.b16 %v2280
    %v2360 = vunpack.c.l.b16 %v2281
    %v2361 = vunpack.c.h.b16 %v2281
    %v2362 = vunpack.c.l.b16 %v2282
    %v2363 = vunpack.c.h.b16 %v2282
    %v2364 = vunpack.c.l.b16 %v2283
    %v2365 = vunpack.c.h.b16 %v2283
    %v2366 = vunpack.c.l.b16 %v2284
    %v2367 = vunpack.c.h.b16 %v2284
    %v2368 = vunpack.c.l.b16 %v2285
    %v2369 = vunpack.c.h.b16 %v2285
    %v2370 = vunpack.c.l.b16 %v2286
    %v2371 = vunpack.c.h.b16 %v2286
    %v2372 = vunpack.c.l.b16 %v2287
    %v2373 = vunpack.c.h.b16 %v2287
    %v2374 = vunpack.c.l.b16 %v2288
    %v2375 = vunpack.c.h.b16 %v2288
    %v2376 = vunpack.c.l.b16 %v2289
    %v2377 = vunpack.c.h.b16 %v2289
    %v2378 = vunpack.c.l.b16 %v2290
    %v2379 = vunpack.c.h.b16 %v2290
    %v2380 = vunpack.c.l.b16 %v2291
    %v2381 = vunpack.c.h.b16 %v2291
    %v2382 = vunpack.c.l.b16 %v2292
    %v2383 = vunpack.c.h.b16 %v2292
    %v2384 = vunpack.c.l.b16 %v2293
    %v2385 = vunpack.c.h.b16 %v2293
    %v2386 = vunpack.c.l.b16 %v2294
    %v2387 = vunpack.c.h.b16 %v2294
    %v2388 = vunpack.c.l.b16 %v2295
    %v2389 = vunpack.c.h.b16 %v2295
    %v2390 = vunpack.c.l.b16 %v2296
    %v2391 = vunpack.c.h.b16 %v2296
    %v2392 = vunpack.c.l.b16 %v2297
    %v2393 = vunpack.c.h.b16 %v2297
    %v2394 = vpack.c.b16 %v2334, %v2330
    %v2395 = vpack.c.b16 %v2335, %v2331
    %v2396 = vpack.c.b16 %v2336, %v2332
    %v2397 = vpack.c.b16 %v2337, %v2333
    %v2398 = vpack.c.b16 %v2342, %v2338
    %v2399 = vpack.c.b16 %v2343, %v2339
    %v2400 = vpack.c.b16 %v2344, %v2340
    %v2401 = vpack.c.b16 %v2345, %v2341
    %v2402 = vpack.c.b16 %v2350, %v2346
    %v2403 = vpack.c.b16 %v2351, %v2347
    %v2404 = vpack.c.b16 %v2352, %v2348
    %v2405 = vpack.c.b16 %v2353, %v2349
    %v2406 = vpack.c.b16 %v2358, %v2354
    %v2407 = vpack.c.b16 %v2359, %v2355
    %v2408 = vpack.c.b16 %v2360, %v2356
    %v2409 = vpack.c.b16 %v2361, %v2357
    %v2410 = vpack.c.b16 %v2366, %v2362
    %v2411 = vpack.c.b16 %v2367, %v2363
    %v2412 = vpack.c.b16 %v2368, %v2364
    %v2413 = vpack.c.b16 %v2369, %v2365
    %v2414 = vpack.c.b16 %v2374, %v2370
    %v2415 = vpack.c.b16 %v2375, %v2371
    %v2416 = vpack.c.b16 %v2376, %v2372
    %v2417 = vpack.c.b16 %v2377, %v2373
    %v2418 = vpack.c.b16 %v2382, %v2378
    %v2419 = vpack.c.b16 %v2383, %v2379
    %v2420 = vpack.c.b16 %v2384, %v2380
    %v2421 = vpack.c.b16 %v2385, %v2381
    %v2422 = vpack.c.b16 %v2390, %v2386
    %v2423 = vpack.c.b16 %v2391, %v2387
    %v2424 = vpack.c.b16 %v2392, %v2388
    %v2425 = vpack.c.b16 %v2393, %v2389
    %2458 = vmatprep.subr.bf16.mxu0 %v2423
    %2459 = vmatpush1.bf16.msra.mxu0 %v2422
    %2460 = vmatprep.subr.bf16.mxu0 %v2419
    %2461 = vmatpush1.bf16.msra.mxu0 %v2418
    %2462 = vmatprep.subr.bf16.mxu0 %v2415
    %2463 = vmatpush1.bf16.msra.mxu0 %v2414
    %2464 = vmatprep.subr.bf16.mxu0 %v2411
    %2465 = vmatpush1.bf16.msra.mxu0 %v2410
    %2466 = vmatprep.subr.bf16.mxu0 %v2407
    %2467 = vmatpush1.bf16.msra.mxu0 %v2406
    %2468 = vmatprep.subr.bf16.mxu0 %v2403
    %2469 = vmatpush1.bf16.msra.mxu0 %v2402
    %2470 = vmatprep.subr.bf16.mxu0 %v2399
    %2471 = vmatpush1.bf16.msra.mxu0 %v2398
    %2472 = vmatprep.subr.bf16.mxu0 %v2395
    %2473 = vmatpush1.bf16.msra.mxu0 %v2394
    %2474 = vmatprep.subr.bf16.mxu0 0
    %2475 = vmatpush2.bf16.msra.mxu0 0
    %2476 = vmatprep.subr.bf16.mxu0 0
    %2477 = vmatpush2.bf16.msra.mxu0 0
    %2478 = vmatprep.subr.bf16.mxu0 0
    %2479 = vmatpush2.bf16.msra.mxu0 0
    %2480 = vmatprep.subr.bf16.mxu0 0
    %2481 = vmatpush2.bf16.msra.mxu0 0
    %2482 = vmatprep.subr.bf16.mxu0 0
    %2483 = vmatpush2.bf16.msra.mxu0 0
    %2484 = vmatprep.subr.bf16.mxu0 0
    %2485 = vmatpush2.bf16.msra.mxu0 0
    %2486 = vmatprep.subr.bf16.mxu0 0
    %2487 = vmatpush2.bf16.msra.mxu0 0
    %2488 = vmatprep.subr.bf16.mxu0 0
    %2489 = vmatpush2.bf16.msra.mxu0 0
    %2490 = vmatprep.mubr.bf16.mxu0 0
    %2491 = vmatmul.mubr.bf16.gmra.mxu0 %v2257
    %v2492 = vpop.f32.mrf.mxu0
    %v2493 = vadd.f32 0.0, %v2492
    %v2494 = vpop.f32.mrf.mxu0
    %v2495 = vadd.f32 0.0, %v2494
    %v2496 = vpop.f32.mrf.mxu0
    %v2497 = vpop.f32.mrf.mxu0
    %2498 = vdwg.mxu0
    %2499 = vmatprep.subr.bf16.mxu0 %v2425
    %2500 = vmatpush1.bf16.msra.mxu0 %v2424
    %2501 = vmatprep.subr.bf16.mxu0 %v2421
    %2502 = vmatpush1.bf16.msra.mxu0 %v2420
    %2503 = vmatprep.subr.bf16.mxu0 %v2417
    %2504 = vmatpush1.bf16.msra.mxu0 %v2416
    %2505 = vmatprep.subr.bf16.mxu0 %v2413
    %2506 = vmatpush1.bf16.msra.mxu0 %v2412
    %2507 = vmatprep.subr.bf16.mxu0 %v2409
    %2508 = vmatpush1.bf16.msra.mxu0 %v2408
    %2509 = vmatprep.subr.bf16.mxu0 %v2405
    %2510 = vmatpush1.bf16.msra.mxu0 %v2404
    %2511 = vmatprep.subr.bf16.mxu0 %v2401
    %2512 = vmatpush1.bf16.msra.mxu0 %v2400
    %2513 = vmatprep.subr.bf16.mxu0 %v2397
    %2514 = vmatpush1.bf16.msra.mxu0 %v2396
    %2515 = vmatprep.subr.bf16.mxu0 0
    %2516 = vmatpush2.bf16.msra.mxu0 0
    %2517 = vmatprep.subr.bf16.mxu0 0
    %2518 = vmatpush2.bf16.msra.mxu0 0
    %2519 = vmatprep.subr.bf16.mxu0 0
    %2520 = vmatpush2.bf16.msra.mxu0 0
    %2521 = vmatprep.subr.bf16.mxu0 0
    %2522 = vmatpush2.bf16.msra.mxu0 0
    %2523 = vmatprep.subr.bf16.mxu0 0
    %2524 = vmatpush2.bf16.msra.mxu0 0
    %2525 = vmatprep.subr.bf16.mxu0 0
    %2526 = vmatpush2.bf16.msra.mxu0 0
    %2527 = vmatprep.subr.bf16.mxu0 0
    %2528 = vmatpush2.bf16.msra.mxu0 0
    %2529 = vmatprep.subr.bf16.mxu0 0
    %2530 = vmatpush2.bf16.msra.mxu0 0
    %2531 = vmatprep.mubr.bf16.mxu0 0
    %2532 = vmatmul.mubr.bf16.gmra.mxu0 %v2257
    %v2533 = vpop.f32.mrf.mxu0
    %v2534 = vadd.f32 0.0, %v2533
    %v2535 = vpop.f32.mrf.mxu0
    %v2536 = vadd.f32 0.0, %v2535
    %v2537 = vpop.f32.mrf.mxu0
    %v2538 = vpop.f32.mrf.mxu0
    %2539 = vdwg.mxu0
    %v2540 = vadd.f32 %v2262, %v2493
    %v2541 = vadd.f32 %v2263, %v2495
    %v2542 = vadd.f32 %v2264, %v2534
    %v2543 = vadd.f32 %v2265, %v2536
    %v2544 = vxor.u32 %v2540, 2147483648
    %v2545 = vmul.f32 %v2544, 1.442695
    %v2546 = vpow.pop %v2545
    %v2547 = vadd.f32 %v2546, 1.0
    %v2548 = vrcp.pop %v2547
    %v2549 = vmul.f32 1.0, %v2548
    %v2550 = vxor.u32 %v2541, 2147483648
    %v2551 = vmul.f32 %v2550, 1.442695
    %v2552 = vpow.pop %v2551
    %v2553 = vadd.f32 %v2552, 1.0
    %v2554 = vrcp.pop %v2553
    %v2555 = vmul.f32 1.0, %v2554
    %v2556 = vtanh.pop %v2542
    %v2557 = vxor.u32 %v2543, 2147483648
    %v2558 = vmul.f32 %v2557, 1.442695
    %v2559 = vpow.pop %v2558
    %v2560 = vadd.f32 %v2559, 1.0
    %v2561 = vrcp.pop %v2560
    %v2562 = vmul.f32 1.0, %v2561
    %v2563 = vmul.f32 %v2555, %v2258
    %v2564 = vmul.f32 %v2549, %v2556
    %v2565 = vadd.f32 %v2563, %v2564
    %v2566 = vtanh.pop %v2565
    %v2567 = vmul.f32 %v2562, %v2566
    %2568 = vst [vmem:[#allocation3] sm:$0xff] %v2565
    %v2569 = vpack.c.bf16 %v2567, %v2567
    %2570 = vst [vmem:[#allocation2] sm:$0xf] %v2569
    %s2571 = scalar_lea.vmem [#allocation9], 28
    %2572 = vst [vmem:[%s2571] sm:$0xf] %v2569
    // Predicated region
    $region22: #{tpu_custom_call.1} parent=1 // pred_check
      _
    $region23: #{tpu_custom_call.1} parent=1 // pred_check_branch
      %2574 = sbr.rel (0) target = $region25
    $region24: #{tpu_custom_call.1} parent=1 // pred_region
      %s2576 = ssub.s32 512, 512
      %2577 = vsyncadd [#allocation6], %s2576
      %s2578 = sshll.u32 [#allocation9], 4
      %s2579 = int_to_ptr.vmem [resolvable:$true] %s2578
      %2584 = dma.vmem_to_hbm [thread:$0]  %s2579, 512, %s2, [#allocation6], 64, 64, 4
    $region25: #{tpu_custom_call.1} parent=1 // pred_fallthru
      _
    // Predicated region
    $region26: #{tpu_custom_call.1} parent=1 // pred_check
      _
    $region27: #{tpu_custom_call.1} parent=1 // pred_check_branch
      %2586 = sbr.rel (0) target = $region29
    $region28: #{tpu_custom_call.1} parent=1 // pred_region
      %2587 = dma.done [#allocation6], 512
    $region29: #{tpu_custom_call.1} parent=1 // pred_fallthru
      _
    %2588 = vsyncpa [#allocation5], 1
    %2589 = vsyncpa [#allocation8], 1
    %2590 = vsyncpa [#allocation6], 1

</llo_original>
